<compile_context>
chip_gen: v6e
topology: v6e:2x2x1
jax: 0.10.0
libtpu: 0.0.40
codegen_flags: <defaults>
</compile_context>

<pallas_src>
import functools

import jax
import jax.numpy as jnp
from jax.experimental import pallas as pl
from jax.experimental.pallas import tpu as pltpu


def _round_up(x: int, m: int) -> int:
    return ((x + m - 1) // m) * m


def _vmem_capacity_bytes() -> int:
    try:
        return int(pltpu.get_tpu_info().vmem_capacity_bytes)
    except Exception:
        return 64 << 20  # conservative fallback: v7x per-TensorCore VMEM


def _mm_attention_kernel(q_ref, kh_ref, vh_ref, wqT_ref, wpT_ref, bp_ref,
                         out_ref, *attn_refs, mm_dtype, approx_recip):
    f32 = jnp.float32
    H, N, hd = kh_ref.shape
    L = q_ref.shape[0]

    # ---- Q projection (scale already folded into Wq^T by the wrapper) ------
    Q = jnp.dot(q_ref[...], wqT_ref[...], preferred_element_type=f32)   # (L, D)
    Qh = jnp.transpose(Q.astype(mm_dtype).reshape(L, H, hd), (1, 0, 2))  # (H, L, hd)

    Kh = kh_ref[...]   # (H, N, hd) — precomputed, resident
    Vh = vh_ref[...]   # (H, N, hd)

    # ---- scores + softmax over N (f32) --------------------------------------
    s = jnp.einsum('hld,hnd->hln', Qh, Kh,
                   preferred_element_type=f32)                 # (H, L, N)
    s = s - jnp.max(s, axis=-1, keepdims=True)
    e = jnp.exp(s)
    p = e * pl.reciprocal(jnp.sum(e, axis=-1, keepdims=True),
                          approx=approx_recip)                 # (H, L, N)

    # head-major store: no transpose/reshape of the largest per-tile tensor.
    if attn_refs:
        attn_refs[0][...] = p.astype(attn_refs[0].dtype)

    # ---- attention-weighted values ------------------------------------------
    o = jnp.einsum('hln,hnd->hld', p.astype(mm_dtype), Vh,
                   preferred_element_type=f32)                 # (H, L, hd)

    # ---- output projection without the (H,L,hd)->(L,H*hd) relayout ----------
    # Per-head matmul against Wp^T reshaped to (H, hd, D), then a head-sum.
    op = jnp.einsum('hld,hdo->hlo', o.astype(mm_dtype), wpT_ref[...],
                    preferred_element_type=f32)                # (H, L, D)
    out_ref[...] = (jnp.sum(op, axis=0) + bp_ref[...]).astype(out_ref.dtype)


def mm_attention(q, k, v, wq, wk, wv, wp, bp, *, num_heads,
                 use_bf16=True, return_attn=True):
    """Forward pass of MMAttention. Returns (out, attn) like the nn.Module.

    use_bf16=True : bf16 MXU operands, f32 accumulation, approx reciprocal,
                    bf16 attn writeback (fast path).
    use_bf16=False: fully f32, reference-exact path.
    return_attn=False skips the attention-probability output entirely
    (its HBM writeback usually dominates this kernel's traffic).
    """
    B, L, D = q.shape
    N = k.shape[0]
    H = num_heads
    hd = D // H
    scale = hd ** (-0.5)
    BL = B * L

    mm_dtype = jnp.bfloat16 if use_bf16 else jnp.float32
    attn_dtype = jnp.bfloat16 if use_bf16 else jnp.float32

    # ---- grid-invariant work hoisted out of the kernel ----------------------
    # K / V projections + head-major split (shared by every query tile).
    Kh = jnp.transpose((k @ wk.T).reshape(N, H, hd), (1, 0, 2)).astype(mm_dtype)
    Vh = jnp.transpose((v @ wv.T).reshape(N, H, hd), (1, 0, 2)).astype(mm_dtype)
    # Fold the softmax scale into Wq^T (saves a (TILE_BL, D) VPU mul per step).
    wqT = (wq.T * scale).astype(mm_dtype)
    # Wp^T split per head: (D_in, D_out) -> (H, hd, D_out).
    wpT = wp.T.reshape(H, hd, D).astype(mm_dtype)
    bp2 = bp.reshape(1, D).astype(jnp.float32)

    # ---- tile selection over the flattened (B, L) axis ----------------------
    align = 16 if use_bf16 else 8        # bf16 packs 16 rows per sublane group
    bl_aligned = _round_up(BL, align)

    vmem_cap = _vmem_capacity_bytes()
    budget = max(vmem_cap - (12 << 20), 32 << 20)   # headroom under physical VMEM

    def _est_bytes(t):
        in_sz = 2 if use_bf16 else 4
        a_sz = 2 if use_bf16 else 4
        tiles = (2 * t * D * in_sz                       # q     (double-buffered)
                 + 2 * t * D * 4                         # out   (double-buffered)
                 + (2 * H * t * N * a_sz if return_attn else 0))   # attn
        resident = (2 * H * N * hd * in_sz               # Kh, Vh (single-buffered)
                    + 2 * D * D * in_sz                  # WqT, WpT
                    + D * 4)                             # bias
        # kernel-internal f32 live values: Q/Qh, s/e/p (+cast), o, per-head proj
        live = 4 * (3 * t * D + 4 * H * t * N + H * t * hd + H * t * D)
        return int(1.25 * (tiles + resident + live))     # layout-padding slack

    tile_bl = align
    for c in sorted({512, 256, 128, 64, 32, 16, align, bl_aligned}, reverse=True):
        if c % align == 0 and c <= bl_aligned and _est_bytes(c) <= budget:
            tile_bl = c
            break

    BL_pad = _round_up(BL, tile_bl)
    grid = (BL_pad // tile_bl,)

    q2 = q.reshape(BL, D)
    if BL_pad != BL:
        q2 = jnp.pad(q2, ((0, BL_pad - BL), (0, 0)))
    q2 = q2.astype(mm_dtype)

    kernel = functools.partial(_mm_attention_kernel,
                               mm_dtype=mm_dtype, approx_recip=use_bf16)

    out_shape = [jax.ShapeDtypeStruct((BL_pad, D), jnp.float32)]
    out_specs = [pl.BlockSpec((tile_bl, D), lambda i: (i, 0))]
    if return_attn:
        out_shape.append(jax.ShapeDtypeStruct((H, BL_pad, N), attn_dtype))
        out_specs.append(pl.BlockSpec((H, tile_bl, N), lambda i: (0, i, 0)))

    def _build(single_buffer_residents):
        res_kw = ({"pipeline_mode": pl.Buffered(1)}
                  if single_buffer_residents else {})
        in_specs = [
            pl.BlockSpec((tile_bl, D), lambda i: (i, 0)),               # q (tiled)
            pl.BlockSpec((H, N, hd), lambda i: (0, 0, 0), **res_kw),    # Kh
            pl.BlockSpec((H, N, hd), lambda i: (0, 0, 0), **res_kw),    # Vh
            pl.BlockSpec((D, D), lambda i: (0, 0), **res_kw),           # Wq^T (scaled)
            pl.BlockSpec((H, hd, D), lambda i: (0, 0, 0), **res_kw),    # Wp^T (split)
            pl.BlockSpec((1, D), lambda i: (0, 0), **res_kw),           # proj bias
        ]
        return pl.pallas_call(
            kernel,
            grid=grid,
            out_shape=tuple(out_shape),
            in_specs=in_specs,
            out_specs=tuple(out_specs),
            compiler_params=pltpu.CompilerParams(
                dimension_semantics=("parallel",),
                vmem_limit_bytes=int(budget)),
        )

    args = (q2, Kh, Vh, wqT, wpT, bp2)
    try:
        results = _build(True)(*args)
    except Exception:
        # Fallback if this jax build rejects Buffered(1) on constant-index
        # inputs; only costs the extra (double) buffering VMEM.
        results = _build(False)(*args)

    if return_attn:
        out, attn = results
        out = out[:BL].reshape(B, L, D)
        attn = jnp.transpose(attn[:, :BL, :].reshape(H, B, L, N), (1, 2, 0, 3))
        return out, attn
    else:
        (out,) = results
        return out[:BL].reshape(B, L, D), None


def mm_attention_reference(q, k, v, wq, wk, wv, wp, bp, *, num_heads):
    B, L, D = q.shape
    hd = D // num_heads
    scale = hd ** (-0.5)
    Q = (q @ wq.T).reshape(B, L, num_heads, hd)
    K = (k @ wk.T).reshape(-1, num_heads, hd)
    V = (v @ wv.T).reshape(-1, num_heads, hd)
    attn = jnp.einsum('blhd,nhd->blhn', Q, K) * scale
    attn = jax.nn.softmax(attn, axis=-1)
    o = jnp.einsum('blhn,nhd->blhd', attn, V).reshape(B, L, D)
    o = o @ wp.T + bp
    return o, attn


if __name__ == "__main__":
    # Small, module-consistent shapes.
    B, L, N, DIM, HEADS = 2, 8, 16, 32, 4

    key = jax.random.PRNGKey(0)
    kq, kk, kv, kwq, kwk, kwv, kwp, kbp = jax.random.split(key, 8)

    q = jax.random.normal(kq, (B, L, DIM), dtype=jnp.float32)
    k = jax.random.normal(kk, (N, DIM), dtype=jnp.float32)
    v = jax.random.normal(kv, (N, DIM), dtype=jnp.float32)

    # Deterministic synthetic parameters (PyTorch Linear stores W as (out, in)).
    wq = 0.05 * jax.random.normal(kwq, (DIM, DIM), dtype=jnp.float32)
    wk = 0.05 * jax.random.normal(kwk, (DIM, DIM), dtype=jnp.float32)
    wv = 0.05 * jax.random.normal(kwv, (DIM, DIM), dtype=jnp.float32)
    wp = 0.05 * jax.random.normal(kwp, (DIM, DIM), dtype=jnp.float32)
    bp = 0.01 * jax.random.normal(kbp, (DIM,), dtype=jnp.float32)

    # Fast path: bf16 MXU operands, f32 accumulation, approx recip, bf16 attn.
    out, attn = mm_attention(q, k, v, wq, wk, wv, wp, bp, num_heads=HEADS)
    jax.block_until_ready((out, attn))

    # Full-precision path: f32 operands, exact reciprocal, f32 attn.
    out32, attn32 = mm_attention(q, k, v, wq, wk, wv, wp, bp,
                                 num_heads=HEADS, use_bf16=False)
    jax.block_until_ready((out32, attn32))

    # No-attn path (skips the dominant HBM writeback entirely).
    out_na, _ = mm_attention(q, k, v, wq, wk, wv, wp, bp,
                             num_heads=HEADS, return_attn=False)
    jax.block_until_ready(out_na)

    out_ref, attn_ref = mm_attention_reference(q, k, v, wq, wk, wv, wp, bp,
                                               num_heads=HEADS)

    assert out.shape == (B, L, DIM)
    assert attn.shape == (B, L, HEADS, N)
    assert out_na.shape == (B, L, DIM)
    # f32 path must match tightly; bf16 path within bf16 tolerance.
    assert jnp.allclose(out32, out_ref, atol=1e-4, rtol=1e-4)
    assert jnp.allclose(attn32, attn_ref, atol=1e-4, rtol=1e-4)
    assert jnp.allclose(out, out_ref, atol=2e-2, rtol=2e-2)
    assert jnp.allclose(attn, attn_ref, atol=2e-2, rtol=2e-2)
    assert jnp.allclose(out_na, out_ref, atol=2e-2, rtol=2e-2)

    print("KERNEL_OK")
</pallas_src>

<mosaic_0001>
module attributes {stable_mosaic.version = 11 : i64} {
  func.func @_mm_attention_kernel(%arg0: i32, %arg1: memref<16x32xbf16, #tpu.memory_space<vmem>>, %arg2: memref<4x16x8xbf16, #tpu.memory_space<vmem>>, %arg3: memref<4x16x8xbf16, #tpu.memory_space<vmem>>, %arg4: memref<32x32xbf16, #tpu.memory_space<vmem>>, %arg5: memref<4x8x32xbf16, #tpu.memory_space<vmem>>, %arg6: memref<1x32xf32, #tpu.memory_space<vmem>>, %arg7: memref<16x32xf32, #tpu.memory_space<vmem>>, %arg8: memref<4x16x16xbf16, #tpu.memory_space<vmem>>) attributes {dimension_semantics = [#tpu.dimension_semantics<parallel>], iteration_bounds = array<i64: 1>, scalar_prefetch = 0 : i64, scratch_operands = 0 : i64, tpu.core_type = #tpu.core_type<tc>, window_params = [{transform_indices = @transform_0, window_bounds = array<i64: 16, 32>}, {pipeline_mode = #tpu.pipeline_mode<synchronous>, transform_indices = @transform_1, window_bounds = array<i64: 4, 16, 8>}, {pipeline_mode = #tpu.pipeline_mode<synchronous>, transform_indices = @transform_2, window_bounds = array<i64: 4, 16, 8>}, {pipeline_mode = #tpu.pipeline_mode<synchronous>, transform_indices = @transform_3, window_bounds = array<i64: 32, 32>}, {pipeline_mode = #tpu.pipeline_mode<synchronous>, transform_indices = @transform_4, window_bounds = array<i64: 4, 8, 32>}, {pipeline_mode = #tpu.pipeline_mode<synchronous>, transform_indices = @transform_5, window_bounds = array<i64: 1, 32>}, {transform_indices = @transform_6, window_bounds = array<i64: 16, 32>}, {transform_indices = @transform_7, window_bounds = array<i64: 4, 16, 16>}]} {
    %c0 = arith.constant 0 : index
    %c0_0 = arith.constant 0 : index
    %0 = vector.load %arg1[%c0, %c0_0] : memref<16x32xbf16, #tpu.memory_space<vmem>>, vector<16x32xbf16>
    %c0_1 = arith.constant 0 : index
    %c0_2 = arith.constant 0 : index
    %1 = vector.load %arg4[%c0_1, %c0_2] : memref<32x32xbf16, #tpu.memory_space<vmem>>, vector<32x32xbf16>
    %cst = arith.constant dense<0.000000e+00> : vector<16x32xf32>
    %2 = tpu.matmul %0, %1, %cst {dimension_numbers = #tpu.dot_dimension_numbers<[1], [0], [0], [1], [0, 0, 1, 1], [], []>} : vector<16x32xbf16>, vector<32x32xbf16>, vector<16x32xf32> -> vector<16x32xf32>
    %3 = arith.truncf %2 : vector<16x32xf32> to vector<16x32xbf16>
    %4 = vector.shape_cast %3 : vector<16x32xbf16> to vector<16x4x8xbf16>
    %5 = tpu.transpose %4, [1, 0, 2] : vector<16x4x8xbf16> -> vector<4x16x8xbf16>
    %c0_3 = arith.constant 0 : index
    %c0_4 = arith.constant 0 : index
    %c0_5 = arith.constant 0 : index
    %6 = vector.load %arg2[%c0_3, %c0_4, %c0_5] : memref<4x16x8xbf16, #tpu.memory_space<vmem>>, vector<4x16x8xbf16>
    %c0_6 = arith.constant 0 : index
    %c0_7 = arith.constant 0 : index
    %c0_8 = arith.constant 0 : index
    %7 = vector.load %arg3[%c0_6, %c0_7, %c0_8] : memref<4x16x8xbf16, #tpu.memory_space<vmem>>, vector<4x16x8xbf16>
    "tpu.trace_start"() <{level = 10 : i32, message = "hld,hnd->hln"}> : () -> ()
    %cst_9 = arith.constant dense<0.000000e+00> : vector<4x16x16xf32>
    %8 = tpu.matmul %5, %6, %cst_9 {dimension_numbers = #tpu.dot_dimension_numbers<[2], [2], [1], [1], [0, 0, 0, 1, 1, 1], [0], [0]>} : vector<4x16x8xbf16>, vector<4x16x8xbf16>, vector<4x16x16xf32> -> vector<4x16x16xf32>
    "tpu.trace_stop"() : () -> ()
    %cst_10 = arith.constant dense<0xFF800000> : vector<4x16xf32>
    %9 = vector.multi_reduction <maximumf>, %8, %cst_10 [2] : vector<4x16x16xf32> to vector<4x16xf32>
    %10 = vector.shape_cast %9 : vector<4x16xf32> to vector<4x16x1xf32>
    %11 = vector.broadcast %10 : vector<4x16x1xf32> to vector<4x16x16xf32>
    %12 = arith.subf %8, %11 : vector<4x16x16xf32>
    %13 = math.exp %12 : vector<4x16x16xf32>
    %cst_11 = arith.constant dense<0.000000e+00> : vector<4x16xf32>
    %14 = vector.multi_reduction <add>, %13, %cst_11 [2] : vector<4x16x16xf32> to vector<4x16xf32>
    %15 = vector.shape_cast %14 : vector<4x16xf32> to vector<4x16x1xf32>
    %16 = tpu.reciprocal %15 {approx = true} : vector<4x16x1xf32> -> vector<4x16x1xf32>
    %17 = vector.broadcast %16 : vector<4x16x1xf32> to vector<4x16x16xf32>
    %18 = arith.mulf %13, %17 : vector<4x16x16xf32>
    %19 = arith.truncf %18 : vector<4x16x16xf32> to vector<4x16x16xbf16>
    %c0_12 = arith.constant 0 : index
    %c0_13 = arith.constant 0 : index
    %c0_14 = arith.constant 0 : index
    %20 = vector.load %arg8[%c0_12, %c0_13, %c0_14] : memref<4x16x16xbf16, #tpu.memory_space<vmem>>, vector<4x16x16xbf16>
    tpu.vector_store %arg8[%c0_12, %c0_13, %c0_14], %19 {strides = array<i32>} : memref<4x16x16xbf16, #tpu.memory_space<vmem>>, vector<4x16x16xbf16>,
    %21 = arith.truncf %18 : vector<4x16x16xf32> to vector<4x16x16xbf16>
    "tpu.trace_start"() <{level = 10 : i32, message = "hln,hnd->hld"}> : () -> ()
    %cst_15 = arith.constant dense<0.000000e+00> : vector<4x16x8xf32>
    %22 = tpu.matmul %21, %7, %cst_15 {dimension_numbers = #tpu.dot_dimension_numbers<[2], [1], [1], [2], [0, 0, 0, 1, 1, 2], [0], [0]>} : vector<4x16x16xbf16>, vector<4x16x8xbf16>, vector<4x16x8xf32> -> vector<4x16x8xf32>
    "tpu.trace_stop"() : () -> ()
    %23 = arith.truncf %22 : vector<4x16x8xf32> to vector<4x16x8xbf16>
    %c0_16 = arith.constant 0 : index
    %c0_17 = arith.constant 0 : index
    %c0_18 = arith.constant 0 : index
    %24 = vector.load %arg5[%c0_16, %c0_17, %c0_18] : memref<4x8x32xbf16, #tpu.memory_space<vmem>>, vector<4x8x32xbf16>
    "tpu.trace_start"() <{level = 10 : i32, message = "hld,hdo->hlo"}> : () -> ()
    %cst_19 = arith.constant dense<0.000000e+00> : vector<4x16x32xf32>
    %25 = tpu.matmul %23, %24, %cst_19 {dimension_numbers = #tpu.dot_dimension_numbers<[2], [1], [1], [2], [0, 0, 0, 1, 1, 2], [0], [0]>} : vector<4x16x8xbf16>, vector<4x8x32xbf16>, vector<4x16x32xf32> -> vector<4x16x32xf32>
    "tpu.trace_stop"() : () -> ()
    %cst_20 = arith.constant dense<0.000000e+00> : vector<16x32xf32>
    %26 = vector.multi_reduction <add>, %25, %cst_20 [0] : vector<4x16x32xf32> to vector<16x32xf32>
    %c0_21 = arith.constant 0 : index
    %c0_22 = arith.constant 0 : index
    %27 = vector.load %arg6[%c0_21, %c0_22] : memref<1x32xf32, #tpu.memory_space<vmem>>, vector<1x32xf32>
    %28 = vector.broadcast %27 : vector<1x32xf32> to vector<16x32xf32>
    %29 = arith.addf %26, %28 : vector<16x32xf32>
    %c0_23 = arith.constant 0 : index
    %c0_24 = arith.constant 0 : index
    %30 = vector.load %arg7[%c0_23, %c0_24] : memref<16x32xf32, #tpu.memory_space<vmem>>, vector<16x32xf32>
    tpu.vector_store %arg7[%c0_23, %c0_24], %29 {strides = array<i32>} : memref<16x32xf32, #tpu.memory_space<vmem>>, vector<16x32xf32>,
    return
  }
  func.func @transform_0(%arg0: i32) -> (i32, i32) {
    %c0_i32 = arith.constant 0 : i32
    %c0_i32_0 = arith.constant 0 : i32
    return %arg0, %c0_i32 : i32, i32
  }
  func.func @transform_1(%arg0: i32) -> (i32, i32, i32) {
    %c0_i32 = arith.constant 0 : i32
    %c0_i32_0 = arith.constant 0 : i32
    %c0_i32_1 = arith.constant 0 : i32
    %c0_i32_2 = arith.constant 0 : i32
    return %c0_i32, %c0_i32_0, %c0_i32_1 : i32, i32, i32
  }
  func.func @transform_2(%arg0: i32) -> (i32, i32, i32) {
    %c0_i32 = arith.constant 0 : i32
    %c0_i32_0 = arith.constant 0 : i32
    %c0_i32_1 = arith.constant 0 : i32
    %c0_i32_2 = arith.constant 0 : i32
    return %c0_i32, %c0_i32_0, %c0_i32_1 : i32, i32, i32
  }
  func.func @transform_3(%arg0: i32) -> (i32, i32) {
    %c0_i32 = arith.constant 0 : i32
    %c0_i32_0 = arith.constant 0 : i32
    %c0_i32_1 = arith.constant 0 : i32
    return %c0_i32, %c0_i32_0 : i32, i32
  }
  func.func @transform_4(%arg0: i32) -> (i32, i32, i32) {
    %c0_i32 = arith.constant 0 : i32
    %c0_i32_0 = arith.constant 0 : i32
    %c0_i32_1 = arith.constant 0 : i32
    %c0_i32_2 = arith.constant 0 : i32
    return %c0_i32, %c0_i32_0, %c0_i32_1 : i32, i32, i32
  }
  func.func @transform_5(%arg0: i32) -> (i32, i32) {
    %c0_i32 = arith.constant 0 : i32
    %c0_i32_0 = arith.constant 0 : i32
    %c0_i32_1 = arith.constant 0 : i32
    return %c0_i32, %c0_i32_0 : i32, i32
  }
  func.func @transform_6(%arg0: i32) -> (i32, i32) {
    %c0_i32 = arith.constant 0 : i32
    %c0_i32_0 = arith.constant 0 : i32
    return %arg0, %c0_i32 : i32, i32
  }
  func.func @transform_7(%arg0: i32) -> (i32, i32, i32) {
    %c0_i32 = arith.constant 0 : i32
    %c0_i32_0 = arith.constant 0 : i32
    %c0_i32_1 = arith.constant 0 : i32
    return %c0_i32, %arg0, %c0_i32_0 : i32, i32, i32
  }
}

module attributes {stable_mosaic.version = 11 : i64} {
  func.func @_mm_attention_kernel(%arg0: i32, %arg1: memref<16x32xbf16, #tpu.memory_space<vmem>>, %arg2: memref<4x16x8xbf16, #tpu.memory_space<vmem>>, %arg3: memref<4x16x8xbf16, #tpu.memory_space<vmem>>, %arg4: memref<32x32xbf16, #tpu.memory_space<vmem>>, %arg5: memref<4x8x32xbf16, #tpu.memory_space<vmem>>, %arg6: memref<1x32xf32, #tpu.memory_space<vmem>>, %arg7: memref<16x32xf32, #tpu.memory_space<vmem>>, %arg8: memref<4x16x16xbf16, #tpu.memory_space<vmem>>) attributes {dimension_semantics = [#tpu.dimension_semantics<parallel>], iteration_bounds = array<i64: 1>, scalar_prefetch = 0 : i64, scratch_operands = 0 : i64, tpu.core_type = #tpu.core_type<tc>, window_params = [{transform_indices = @transform_0, window_bounds = array<i64: 16, 32>}, {pipeline_mode = #tpu.pipeline_mode<synchronous>, transform_indices = @transform_1, window_bounds = array<i64: 4, 16, 8>}, {pipeline_mode = #tpu.pipeline_mode<synchronous>, transform_indices = @transform_2, window_bounds = array<i64: 4, 16, 8>}, {pipeline_mode = #tpu.pipeline_mode<synchronous>, transform_indices = @transform_3, window_bounds = array<i64: 32, 32>}, {pipeline_mode = #tpu.pipeline_mode<synchronous>, transform_indices = @transform_4, window_bounds = array<i64: 4, 8, 32>}, {pipeline_mode = #tpu.pipeline_mode<synchronous>, transform_indices = @transform_5, window_bounds = array<i64: 1, 32>}, {transform_indices = @transform_6, window_bounds = array<i64: 16, 32>}, {transform_indices = @transform_7, window_bounds = array<i64: 4, 16, 16>}]} {
    %c0 = arith.constant 0 : index
    %c0_0 = arith.constant 0 : index
    %0 = vector.load %arg1[%c0, %c0_0] : memref<16x32xbf16, #tpu.memory_space<vmem>>, vector<16x32xbf16>
    %c0_1 = arith.constant 0 : index
    %c0_2 = arith.constant 0 : index
    %1 = vector.load %arg4[%c0_1, %c0_2] : memref<32x32xbf16, #tpu.memory_space<vmem>>, vector<32x32xbf16>
    %cst = arith.constant dense<0.000000e+00> : vector<16x32xf32>
    %2 = tpu.matmul %0, %1, %cst {dimension_numbers = #tpu.dot_dimension_numbers<[1], [0], [0], [1], [0, 0, 1, 1], [], []>} : vector<16x32xbf16>, vector<32x32xbf16>, vector<16x32xf32> -> vector<16x32xf32>
    %3 = arith.truncf %2 : vector<16x32xf32> to vector<16x32xbf16>
    %4 = vector.shape_cast %3 : vector<16x32xbf16> to vector<16x4x8xbf16>
    %5 = tpu.transpose %4, [1, 0, 2] : vector<16x4x8xbf16> -> vector<4x16x8xbf16>
    %c0_3 = arith.constant 0 : index
    %c0_4 = arith.constant 0 : index
    %c0_5 = arith.constant 0 : index
    %6 = vector.load %arg2[%c0_3, %c0_4, %c0_5] : memref<4x16x8xbf16, #tpu.memory_space<vmem>>, vector<4x16x8xbf16>
    %c0_6 = arith.constant 0 : index
    %c0_7 = arith.constant 0 : index
    %c0_8 = arith.constant 0 : index
    %7 = vector.load %arg3[%c0_6, %c0_7, %c0_8] : memref<4x16x8xbf16, #tpu.memory_space<vmem>>, vector<4x16x8xbf16>
    "tpu.trace_start"() <{level = 10 : i32, message = "hld,hnd->hln"}> : () -> ()
    %cst_9 = arith.constant dense<0.000000e+00> : vector<4x16x16xf32>
    %8 = tpu.matmul %5, %6, %cst_9 {dimension_numbers = #tpu.dot_dimension_numbers<[2], [2], [1], [1], [0, 0, 0, 1, 1, 1], [0], [0]>} : vector<4x16x8xbf16>, vector<4x16x8xbf16>, vector<4x16x16xf32> -> vector<4x16x16xf32>
    "tpu.trace_stop"() : () -> ()
    %cst_10 = arith.constant dense<0xFF800000> : vector<4x16xf32>
    %9 = vector.multi_reduction <maximumf>, %8, %cst_10 [2] : vector<4x16x16xf32> to vector<4x16xf32>
    %10 = vector.shape_cast %9 : vector<4x16xf32> to vector<4x16x1xf32>
    %11 = vector.broadcast %10 : vector<4x16x1xf32> to vector<4x16x16xf32>
    %12 = arith.subf %8, %11 : vector<4x16x16xf32>
    %13 = math.exp %12 : vector<4x16x16xf32>
    %cst_11 = arith.constant dense<0.000000e+00> : vector<4x16xf32>
    %14 = vector.multi_reduction <add>, %13, %cst_11 [2] : vector<4x16x16xf32> to vector<4x16xf32>
    %15 = vector.shape_cast %14 : vector<4x16xf32> to vector<4x16x1xf32>
    %16 = tpu.reciprocal %15 {approx = true} : vector<4x16x1xf32> -> vector<4x16x1xf32>
    %17 = vector.broadcast %16 : vector<4x16x1xf32> to vector<4x16x16xf32>
    %18 = arith.mulf %13, %17 : vector<4x16x16xf32>
    %19 = arith.truncf %18 : vector<4x16x16xf32> to vector<4x16x16xbf16>
    %c0_12 = arith.constant 0 : index
    %c0_13 = arith.constant 0 : index
    %c0_14 = arith.constant 0 : index
    %20 = vector.load %arg8[%c0_12, %c0_13, %c0_14] : memref<4x16x16xbf16, #tpu.memory_space<vmem>>, vector<4x16x16xbf16>
    tpu.vector_store %arg8[%c0_12, %c0_13, %c0_14], %19 {strides = array<i32>} : memref<4x16x16xbf16, #tpu.memory_space<vmem>>, vector<4x16x16xbf16>,
    %21 = arith.truncf %18 : vector<4x16x16xf32> to vector<4x16x16xbf16>
    "tpu.trace_start"() <{level = 10 : i32, message = "hln,hnd->hld"}> : () -> ()
    %cst_15 = arith.constant dense<0.000000e+00> : vector<4x16x8xf32>
    %22 = tpu.matmul %21, %7, %cst_15 {dimension_numbers = #tpu.dot_dimension_numbers<[2], [1], [1], [2], [0, 0, 0, 1, 1, 2], [0], [0]>} : vector<4x16x16xbf16>, vector<4x16x8xbf16>, vector<4x16x8xf32> -> vector<4x16x8xf32>
    "tpu.trace_stop"() : () -> ()
    %23 = arith.truncf %22 : vector<4x16x8xf32> to vector<4x16x8xbf16>
    %c0_16 = arith.constant 0 : index
    %c0_17 = arith.constant 0 : index
    %c0_18 = arith.constant 0 : index
    %24 = vector.load %arg5[%c0_16, %c0_17, %c0_18] : memref<4x8x32xbf16, #tpu.memory_space<vmem>>, vector<4x8x32xbf16>
    "tpu.trace_start"() <{level = 10 : i32, message = "hld,hdo->hlo"}> : () -> ()
    %cst_19 = arith.constant dense<0.000000e+00> : vector<4x16x32xf32>
    %25 = tpu.matmul %23, %24, %cst_19 {dimension_numbers = #tpu.dot_dimension_numbers<[2], [1], [1], [2], [0, 0, 0, 1, 1, 2], [0], [0]>} : vector<4x16x8xbf16>, vector<4x8x32xbf16>, vector<4x16x32xf32> -> vector<4x16x32xf32>
    "tpu.trace_stop"() : () -> ()
    %cst_20 = arith.constant dense<0.000000e+00> : vector<16x32xf32>
    %26 = vector.multi_reduction <add>, %25, %cst_20 [0] : vector<4x16x32xf32> to vector<16x32xf32>
    %c0_21 = arith.constant 0 : index
    %c0_22 = arith.constant 0 : index
    %27 = vector.load %arg6[%c0_21, %c0_22] : memref<1x32xf32, #tpu.memory_space<vmem>>, vector<1x32xf32>
    %28 = vector.broadcast %27 : vector<1x32xf32> to vector<16x32xf32>
    %29 = arith.addf %26, %28 : vector<16x32xf32>
    %c0_23 = arith.constant 0 : index
    %c0_24 = arith.constant 0 : index
    %30 = vector.load %arg7[%c0_23, %c0_24] : memref<16x32xf32, #tpu.memory_space<vmem>>, vector<16x32xf32>
    tpu.vector_store %arg7[%c0_23, %c0_24], %29 {strides = array<i32>} : memref<16x32xf32, #tpu.memory_space<vmem>>, vector<16x32xf32>,
    return
  }
  func.func @transform_0(%arg0: i32) -> (i32, i32) {
    %c0_i32 = arith.constant 0 : i32
    %c0_i32_0 = arith.constant 0 : i32
    return %arg0, %c0_i32 : i32, i32
  }
  func.func @transform_1(%arg0: i32) -> (i32, i32, i32) {
    %c0_i32 = arith.constant 0 : i32
    %c0_i32_0 = arith.constant 0 : i32
    %c0_i32_1 = arith.constant 0 : i32
    %c0_i32_2 = arith.constant 0 : i32
    return %c0_i32, %c0_i32_0, %c0_i32_1 : i32, i32, i32
  }
  func.func @transform_2(%arg0: i32) -> (i32, i32, i32) {
    %c0_i32 = arith.constant 0 : i32
    %c0_i32_0 = arith.constant 0 : i32
    %c0_i32_1 = arith.constant 0 : i32
    %c0_i32_2 = arith.constant 0 : i32
    return %c0_i32, %c0_i32_0, %c0_i32_1 : i32, i32, i32
  }
  func.func @transform_3(%arg0: i32) -> (i32, i32) {
    %c0_i32 = arith.constant 0 : i32
    %c0_i32_0 = arith.constant 0 : i32
    %c0_i32_1 = arith.constant 0 : i32
    return %c0_i32, %c0_i32_0 : i32, i32
  }
  func.func @transform_4(%arg0: i32) -> (i32, i32, i32) {
    %c0_i32 = arith.constant 0 : i32
    %c0_i32_0 = arith.constant 0 : i32
    %c0_i32_1 = arith.constant 0 : i32
    %c0_i32_2 = arith.constant 0 : i32
    return %c0_i32, %c0_i32_0, %c0_i32_1 : i32, i32, i32
  }
  func.func @transform_5(%arg0: i32) -> (i32, i32) {
    %c0_i32 = arith.constant 0 : i32
    %c0_i32_0 = arith.constant 0 : i32
    %c0_i32_1 = arith.constant 0 : i32
    return %c0_i32, %c0_i32_0 : i32, i32
  }
  func.func @transform_6(%arg0: i32) -> (i32, i32) {
    %c0_i32 = arith.constant 0 : i32
    %c0_i32_0 = arith.constant 0 : i32
    return %arg0, %c0_i32 : i32, i32
  }
  func.func @transform_7(%arg0: i32) -> (i32, i32, i32) {
    %c0_i32 = arith.constant 0 : i32
    %c0_i32_0 = arith.constant 0 : i32
    %c0_i32_1 = arith.constant 0 : i32
    return %c0_i32, %arg0, %c0_i32_0 : i32, i32, i32
  }
}

</mosaic_0001>

<llo_original>
// kernel: tpu_custom_call.1
$region0: #{tpu_custom_call.1}
  #allocation0 [shape = 'u32[]', space=smem, size = 0x4, offset = 0x4, fixed_abs, tag = 'smem constant byte address 0x4 - core index']
  #allocation1 [shape = 'u32[144,128]{1,0:T(1,128)}', space=vmem, size = 0x12000, scoped, tag = 'internal scratch']
  %s0 = inlined_call_operand.vmem [shape: bf16[16,32], index: 0, kind: input, shape index: {}]
  %s1 = inlined_call_operand.vmem [shape: bf16[4,16,8], index: 1, kind: input, shape index: {}]
  %s2 = inlined_call_operand.vmem [shape: bf16[4,16,8], index: 2, kind: input, shape index: {}]
  %s3 = inlined_call_operand.vmem [shape: bf16[32,32], index: 3, kind: input, shape index: {}]
  %s4 = inlined_call_operand.vmem [shape: bf16[4,8,32], index: 4, kind: input, shape index: {}]
  %s5 = inlined_call_operand.vmem [shape: f32[1,32], index: 5, kind: input, shape index: {}]
  %s6 = inlined_call_operand.hbm [shape: f32[16,32], index: 6, kind: output, shape index: {0}]
  %s7 = inlined_call_operand.hbm [shape: bf16[4,16,16], index: 7, kind: output, shape index: {1}]
  %8 = xla_tuple %s6, %s7
  %s9 = sld [smem:[#allocation0]]
  $region42: #{tpu_custom_call.1} parent=0
    _
  %s11 = ssub.s32 1, %s9
  %s12 = scalar_select 0, %s11, %s9
  $region1: #{tpu_custom_call.1} parent=0
    #allocation2 [shape = 'u8[8192]{0}', space=vmem, size = 0x2000, scoped, tag = 'output window, operand 0, single buffered']
    #allocation3 [shape = 's32[1]{0}', space=sflag, size = 0x4, scoped, tag = 'scoped memory for tpu_custom_call.1']
    #allocation4 [shape = 'u8[16384]{0}', space=vmem, size = 0x4000, scoped, tag = 'output window, operand 1, single buffered']
    #allocation5 [shape = 's32[1]{0}', space=sflag, size = 0x4, scoped, tag = 'scoped memory for tpu_custom_call.1']
    %13 = vsyncpa [#allocation3], 0
    %14 = vsyncpa [#allocation5], 0
    // Predicated region
    $region2: #{tpu_custom_call.1} parent=1 // pred_check
      _
    $region3: #{tpu_custom_call.1} parent=1 // pred_check_branch
      %16 = sbr.rel (0) target = $region5
    $region4: #{tpu_custom_call.1} parent=1 // pred_region
      _
    $region5: #{tpu_custom_call.1} parent=1 // pred_fallthru
      _
    // Predicated region
    $region6: #{tpu_custom_call.1} parent=1 // pred_check
      _
    $region7: #{tpu_custom_call.1} parent=1 // pred_check_branch
      %18 = sbr.rel (0) target = $region9
    $region8: #{tpu_custom_call.1} parent=1 // pred_region
      _
    $region9: #{tpu_custom_call.1} parent=1 // pred_fallthru
      _
    // Predicated region
    $region10: #{tpu_custom_call.1} parent=1 // pred_check
      _
    $region11: #{tpu_custom_call.1} parent=1 // pred_check_branch
      %20 = sbr.rel (0) target = $region13
    $region12: #{tpu_custom_call.1} parent=1 // pred_region
      _
    $region13: #{tpu_custom_call.1} parent=1 // pred_fallthru
      _
    // Predicated region
    $region14: #{tpu_custom_call.1} parent=1 // pred_check
      _
    $region15: #{tpu_custom_call.1} parent=1 // pred_check_branch
      %22 = sbr.rel (0) target = $region17
    $region16: #{tpu_custom_call.1} parent=1 // pred_region
      _
    $region17: #{tpu_custom_call.1} parent=1 // pred_fallthru
      _
    // Predicated region
    $region18: #{tpu_custom_call.1} parent=1 // pred_check
      _
    $region19: #{tpu_custom_call.1} parent=1 // pred_check_branch
      %24 = sbr.rel (0) target = $region21
    $region20: #{tpu_custom_call.1} parent=1 // pred_region
      _
    $region21: #{tpu_custom_call.1} parent=1 // pred_fallthru
      _
    // Predicated region
    $region22: #{tpu_custom_call.1} parent=1 // pred_check
      _
    $region23: #{tpu_custom_call.1} parent=1 // pred_check_branch
      %26 = sbr.rel (0) target = $region25
    $region24: #{tpu_custom_call.1} parent=1 // pred_region
      _
    $region25: #{tpu_custom_call.1} parent=1 // pred_fallthru
      _
    %v28 = vld [vmem:[%s0] sm:$0xf]
    %v29 = vld [vmem:[%s0 + $0x4] sm:$0xf]
    %v30 = vld [vmem:[%s3] sm:$0xf]
    %v31 = vld [vmem:[%s3 + $0x4] sm:$0xf]
    %v32 = vld [vmem:[%s3 + $0x8] sm:$0xf]
    %v33 = vld [vmem:[%s3 + $0xc] sm:$0xf]
    %v36 = vunpack.c.l.b16 %v28
    %v37 = vunpack.c.l.b16 %v29
    %v38 = vpack.c.b16 %v37, %v36
    %v43 = vunpack.c.l.b16 %v30
    %v44 = vunpack.c.l.b16 %v31
    %v45 = vunpack.c.l.b16 %v32
    %v46 = vunpack.c.l.b16 %v33
    %v47 = vpack.c.b16 %v44, %v43
    %v48 = vpack.c.b16 %v46, %v45
    %vm51 = vcmask 261120
    %v53 = vsel %vm51, %v38, 0
    %55 = vmatprep.subr.bf16.mxu0 0
    %56 = vmatpush1.bf16.msra.mxu0 0
    %57 = vmatprep.subr.bf16.mxu0 0
    %58 = vmatpush1.bf16.msra.mxu0 0
    %59 = vmatprep.subr.bf16.mxu0 0
    %60 = vmatpush1.bf16.msra.mxu0 0
    %61 = vmatprep.subr.bf16.mxu0 0
    %62 = vmatpush1.bf16.msra.mxu0 0
    %63 = vmatprep.subr.bf16.mxu0 0
    %64 = vmatpush1.bf16.msra.mxu0 0
    %65 = vmatprep.subr.bf16.mxu0 0
    %66 = vmatpush1.bf16.msra.mxu0 0
    %67 = vmatprep.subr.bf16.mxu0 0
    %68 = vmatpush1.bf16.msra.mxu0 %v48
    %69 = vmatprep.subr.bf16.mxu0 0
    %70 = vmatpush1.bf16.msra.mxu0 %v47
    %71 = vmatprep.subr.bf16.mxu0 0
    %72 = vmatpush2.bf16.msra.mxu0 0
    %73 = vmatprep.subr.bf16.mxu0 0
    %74 = vmatpush2.bf16.msra.mxu0 0
    %75 = vmatprep.subr.bf16.mxu0 0
    %76 = vmatpush2.bf16.msra.mxu0 0
    %77 = vmatprep.subr.bf16.mxu0 0
    %78 = vmatpush2.bf16.msra.mxu0 0
    %79 = vmatprep.subr.bf16.mxu0 0
    %80 = vmatpush2.bf16.msra.mxu0 0
    %81 = vmatprep.subr.bf16.mxu0 0
    %82 = vmatpush2.bf16.msra.mxu0 0
    %83 = vmatprep.subr.bf16.mxu0 0
    %84 = vmatpush2.bf16.msra.mxu0 0
    %85 = vmatprep.subr.bf16.mxu0 0
    %86 = vmatpush2.bf16.msra.mxu0 0
    %87 = vmatprep.mubr.bf16.mxu0 0
    %88 = vmatmul.mubr.bf16.gmra.mxu0 %v53
    %v89 = vpop.f32.mrf.mxu0
    %v90 = vadd.f32 0.0, %v89
    %v91 = vpop.f32.mrf.mxu0
    %v92 = vpop.f32.mrf.mxu0
    %v93 = vadd.f32 0.0, %v92
    %v94 = vpop.f32.mrf.mxu0
    %95 = vdwg.mxu0
    %v96 = vpack.c.bf16 %v93, %v90
    %98 = vrot.lane.b32.xlu0 %v96, 120
    %v99 = vpop.permute.xlu0 %98
    %100 = vrot.lane.b32.xlu0 %v96, 112
    %v101 = vpop.permute.xlu0 %100
    %102 = vrot.lane.b32.xlu0 %v96, 104
    %v103 = vpop.permute.xlu0 %102
    %v106 = vpack.i.b16 %v99, %v96
    %v108 = vshrl.u32 %v96, 16
    %v109 = vshrl.u32 %v99, 16
    %v110 = vpack.i.b16 %v109, %v108
    %v114 = vpack.i.b16 %v103, %v101
    %v116 = vshrl.u32 %v101, 16
    %v117 = vshrl.u32 %v103, 16
    %v118 = vpack.i.b16 %v117, %v116
    %v121 = vpack.i.b16 0, 0
    %v123 = vshrl.u32 0, 16
    %v124 = vpack.i.b16 %v123, %v123
    %v126 = vcombine.high %v106, %v121
    %v128 = vunpack.c.l.s4 1983009808
    %v129 = vunpack.c.0.s8 %v128
    %v130 = vlaneseq
    %v131 = vshrl.u32 %v130, 7
    %v132 = vsub.s32 %v129, %v131
    %v133 = vrot.slane %v106, %v132
    %v135 = vunpack.c.l.s4 1983009808
    %v136 = vunpack.c.0.s8 %v135
    %v137 = vlaneseq
    %v138 = vshrl.u32 %v137, 7
    %v139 = vsub.s32 %v136, %v138
    %v140 = vrot.slane %v126, %v139
    %v141 = vcombine.high %v114, %v121
    %v143 = vunpack.c.l.s4 1983009808
    %v144 = vunpack.c.0.s8 %v143
    %v145 = vlaneseq
    %v146 = vshrl.u32 %v145, 7
    %v147 = vsub.s32 %v144, %v146
    %v148 = vrot.slane %v114, %v147
    %v150 = vunpack.c.l.s4 1983009808
    %v151 = vunpack.c.0.s8 %v150
    %v152 = vlaneseq
    %v153 = vshrl.u32 %v152, 7
    %v154 = vsub.s32 %v151, %v153
    %v155 = vrot.slane %v141, %v154
    %v156 = vcombine.low %v133, %v148
    %v157 = vcombine.high %v133, %v148
    %v159 = vunpack.c.l.s4 1934713408
    %v160 = vunpack.c.0.s8 %v159
    %v161 = vlaneseq
    %v162 = vshrl.u32 %v161, 7
    %v163 = vsub.s32 %v160, %v162
    %v164 = vrot.slane %v156, %v163
    %v166 = vunpack.c.l.s4 1934713408
    %v167 = vunpack.c.0.s8 %v166
    %v168 = vlaneseq
    %v169 = vshrl.u32 %v168, 7
    %v170 = vsub.s32 %v167, %v169
    %v171 = vrot.slane %v157, %v170
    %v172 = vcombine.low %v140, %v155
    %v173 = vcombine.high %v140, %v155
    %v175 = vunpack.c.l.s4 1934713408
    %v176 = vunpack.c.0.s8 %v175
    %v177 = vlaneseq
    %v178 = vshrl.u32 %v177, 7
    %v179 = vsub.s32 %v176, %v178
    %v180 = vrot.slane %v172, %v179
    %v182 = vunpack.c.l.s4 1934713408
    %v183 = vunpack.c.0.s8 %v182
    %v184 = vlaneseq
    %v185 = vshrl.u32 %v184, 7
    %v186 = vsub.s32 %v183, %v185
    %v187 = vrot.slane %v173, %v186
    %v188 = vcombine.high %v164, 0
    %v189 = vcombine.high %v171, 0
    %v190 = vcombine.high %v180, 0
    %v191 = vcombine.high %v187, 0
    %v192 = vcombine.high %v110, %v124
    %v194 = vunpack.c.l.s4 1983009808
    %v195 = vunpack.c.0.s8 %v194
    %v196 = vlaneseq
    %v197 = vshrl.u32 %v196, 7
    %v198 = vsub.s32 %v195, %v197
    %v199 = vrot.slane %v110, %v198
    %v201 = vunpack.c.l.s4 1983009808
    %v202 = vunpack.c.0.s8 %v201
    %v203 = vlaneseq
    %v204 = vshrl.u32 %v203, 7
    %v205 = vsub.s32 %v202, %v204
    %v206 = vrot.slane %v192, %v205
    %v207 = vcombine.high %v118, %v124
    %v209 = vunpack.c.l.s4 1983009808
    %v210 = vunpack.c.0.s8 %v209
    %v211 = vlaneseq
    %v212 = vshrl.u32 %v211, 7
    %v213 = vsub.s32 %v210, %v212
    %v214 = vrot.slane %v118, %v213
    %v216 = vunpack.c.l.s4 1983009808
    %v217 = vunpack.c.0.s8 %v216
    %v218 = vlaneseq
    %v219 = vshrl.u32 %v218, 7
    %v220 = vsub.s32 %v217, %v219
    %v221 = vrot.slane %v207, %v220
    %v222 = vcombine.low %v199, %v214
    %v223 = vcombine.high %v199, %v214
    %v225 = vunpack.c.l.s4 1934713408
    %v226 = vunpack.c.0.s8 %v225
    %v227 = vlaneseq
    %v228 = vshrl.u32 %v227, 7
    %v229 = vsub.s32 %v226, %v228
    %v230 = vrot.slane %v222, %v229
    %v232 = vunpack.c.l.s4 1934713408
    %v233 = vunpack.c.0.s8 %v232
    %v234 = vlaneseq
    %v235 = vshrl.u32 %v234, 7
    %v236 = vsub.s32 %v233, %v235
    %v237 = vrot.slane %v223, %v236
    %v238 = vcombine.low %v206, %v221
    %v239 = vcombine.high %v206, %v221
    %v241 = vunpack.c.l.s4 1934713408
    %v242 = vunpack.c.0.s8 %v241
    %v243 = vlaneseq
    %v244 = vshrl.u32 %v243, 7
    %v245 = vsub.s32 %v242, %v244
    %v246 = vrot.slane %v238, %v245
    %v248 = vunpack.c.l.s4 1934713408
    %v249 = vunpack.c.0.s8 %v248
    %v250 = vlaneseq
    %v251 = vshrl.u32 %v250, 7
    %v252 = vsub.s32 %v249, %v251
    %v253 = vrot.slane %v239, %v252
    %v254 = vcombine.high %v230, 0
    %v255 = vcombine.high %v237, 0
    %v256 = vcombine.high %v246, 0
    %v257 = vcombine.high %v253, 0
    %v258 = vcombine.low %v164, %v171
    %v260 = vunpack.c.l.s4 1983009808
    %v261 = vunpack.c.0.s8 %v260
    %v262 = vlaneseq
    %v263 = vshrl.u32 %v262, 7
    %v264 = vsub.s32 %v261, %v263
    %v265 = vrot.slane %v258, %v264
    %v266 = vcombine.low %v188, %v189
    %v268 = vunpack.c.l.s4 1983009808
    %v269 = vunpack.c.0.s8 %v268
    %v270 = vlaneseq
    %v271 = vshrl.u32 %v270, 7
    %v272 = vsub.s32 %v269, %v271
    %v273 = vrot.slane %v266, %v272
    %v274 = vcombine.low %v180, %v187
    %v276 = vunpack.c.l.s4 1983009808
    %v277 = vunpack.c.0.s8 %v276
    %v278 = vlaneseq
    %v279 = vshrl.u32 %v278, 7
    %v280 = vsub.s32 %v277, %v279
    %v281 = vrot.slane %v274, %v280
    %v282 = vcombine.low %v190, %v191
    %v284 = vunpack.c.l.s4 1983009808
    %v285 = vunpack.c.0.s8 %v284
    %v286 = vlaneseq
    %v287 = vshrl.u32 %v286, 7
    %v288 = vsub.s32 %v285, %v287
    %v289 = vrot.slane %v282, %v288
    %v290 = vcombine.low %v265, %v273
    %v292 = vunpack.c.l.s4 1934713408
    %v293 = vunpack.c.0.s8 %v292
    %v294 = vlaneseq
    %v295 = vshrl.u32 %v294, 7
    %v296 = vsub.s32 %v293, %v295
    %v297 = vrot.slane %v290, %v296
    %v298 = vcombine.low %v281, %v289
    %v300 = vunpack.c.l.s4 1934713408
    %v301 = vunpack.c.0.s8 %v300
    %v302 = vlaneseq
    %v303 = vshrl.u32 %v302, 7
    %v304 = vsub.s32 %v301, %v303
    %v305 = vrot.slane %v298, %v304
    %v306 = vcombine.low %v297, %v305
    %v307 = vcombine.high %v297, %v305
    %v308 = vcombine.low %v230, %v237
    %v310 = vunpack.c.l.s4 1983009808
    %v311 = vunpack.c.0.s8 %v310
    %v312 = vlaneseq
    %v313 = vshrl.u32 %v312, 7
    %v314 = vsub.s32 %v311, %v313
    %v315 = vrot.slane %v308, %v314
    %v316 = vcombine.low %v254, %v255
    %v318 = vunpack.c.l.s4 1983009808
    %v319 = vunpack.c.0.s8 %v318
    %v320 = vlaneseq
    %v321 = vshrl.u32 %v320, 7
    %v322 = vsub.s32 %v319, %v321
    %v323 = vrot.slane %v316, %v322
    %v324 = vcombine.low %v246, %v253
    %v326 = vunpack.c.l.s4 1983009808
    %v327 = vunpack.c.0.s8 %v326
    %v328 = vlaneseq
    %v329 = vshrl.u32 %v328, 7
    %v330 = vsub.s32 %v327, %v329
    %v331 = vrot.slane %v324, %v330
    %v332 = vcombine.low %v256, %v257
    %v334 = vunpack.c.l.s4 1983009808
    %v335 = vunpack.c.0.s8 %v334
    %v336 = vlaneseq
    %v337 = vshrl.u32 %v336, 7
    %v338 = vsub.s32 %v335, %v337
    %v339 = vrot.slane %v332, %v338
    %v340 = vcombine.low %v315, %v323
    %v342 = vunpack.c.l.s4 1934713408
    %v343 = vunpack.c.0.s8 %v342
    %v344 = vlaneseq
    %v345 = vshrl.u32 %v344, 7
    %v346 = vsub.s32 %v343, %v345
    %v347 = vrot.slane %v340, %v346
    %v348 = vcombine.low %v331, %v339
    %v350 = vunpack.c.l.s4 1934713408
    %v351 = vunpack.c.0.s8 %v350
    %v352 = vlaneseq
    %v353 = vshrl.u32 %v352, 7
    %v354 = vsub.s32 %v351, %v353
    %v355 = vrot.slane %v348, %v354
    %v356 = vcombine.low %v347, %v355
    %v357 = vcombine.high %v347, %v355
    %v360 = vpack.i.b16 %v356, %v306
    %v361 = vshrl.u32 %v306, 16
    %v362 = vshrl.u32 %v356, 16
    %v363 = vpack.i.b16 %v362, %v361
    %v366 = vpack.i.b16 %v357, %v307
    %v367 = vshrl.u32 %v307, 16
    %v368 = vshrl.u32 %v357, 16
    %v369 = vpack.i.b16 %v368, %v367
    %v370 = vld [vmem:[%s1] sm:$0xf]
    %v371 = vld [vmem:[%s1 + $0x4] sm:$0xf]
    %v372 = vld [vmem:[%s1 + $0x8] sm:$0xf]
    %v373 = vld [vmem:[%s1 + $0xc] sm:$0xf]
    %v374 = vld [vmem:[%s1 + $0x10] sm:$0xf]
    %v375 = vld [vmem:[%s1 + $0x14] sm:$0xf]
    %v376 = vld [vmem:[%s1 + $0x18] sm:$0xf]
    %v377 = vld [vmem:[%s1 + $0x1c] sm:$0xf]
    %v378 = vld [vmem:[%s2] sm:$0xf]
    %v379 = vld [vmem:[%s2 + $0x4] sm:$0xf]
    %v380 = vld [vmem:[%s2 + $0x8] sm:$0xf]
    %v381 = vld [vmem:[%s2 + $0xc] sm:$0xf]
    %v382 = vld [vmem:[%s2 + $0x10] sm:$0xf]
    %v383 = vld [vmem:[%s2 + $0x14] sm:$0xf]
    %v384 = vld [vmem:[%s2 + $0x18] sm:$0xf]
    %v385 = vld [vmem:[%s2 + $0x1c] sm:$0xf]
    %v388 = vunpack.c.l.b16 %v370
    %v389 = vunpack.c.l.b16 %v371
    %v390 = vpack.c.b16 %v389, %v388
    %vm391 = vcmask 64512
    %v393 = vsel %vm391, %v360, 0
    %v396 = vsel %vm391, %v390, 0
    %398 = vmatprep.subr.bf16.mxu0 0
    %399 = vmatpush1.bf16.xpose.msra.mxu0 0
    %400 = vmatprep.subr.bf16.mxu0 0
    %401 = vmatpush1.bf16.xpose.msra.mxu0 0
    %402 = vmatprep.subr.bf16.mxu0 0
    %403 = vmatpush1.bf16.xpose.msra.mxu0 0
    %404 = vmatprep.subr.bf16.mxu0 0
    %405 = vmatpush1.bf16.xpose.msra.mxu0 0
    %406 = vmatprep.subr.bf16.mxu0 0
    %407 = vmatpush1.bf16.xpose.msra.mxu0 0
    %408 = vmatprep.subr.bf16.mxu0 0
    %409 = vmatpush1.bf16.xpose.msra.mxu0 0
    %410 = vmatprep.subr.bf16.mxu0 0
    %411 = vmatpush1.bf16.xpose.msra.mxu0 0
    %412 = vmatprep.subr.bf16.mxu0 0
    %413 = vmatpush1.bf16.xpose.msra.mxu0 %v396
    %414 = vmatprep.subr.bf16.mxu0 0
    %415 = vmatpush2.bf16.xpose.msra.mxu0 0
    %416 = vmatprep.subr.bf16.mxu0 0
    %417 = vmatpush2.bf16.xpose.msra.mxu0 0
    %418 = vmatprep.subr.bf16.mxu0 0
    %419 = vmatpush2.bf16.xpose.msra.mxu0 0
    %420 = vmatprep.subr.bf16.mxu0 0
    %421 = vmatpush2.bf16.xpose.msra.mxu0 0
    %422 = vmatprep.subr.bf16.mxu0 0
    %423 = vmatpush2.bf16.xpose.msra.mxu0 0
    %424 = vmatprep.subr.bf16.mxu0 0
    %425 = vmatpush2.bf16.xpose.msra.mxu0 0
    %426 = vmatprep.subr.bf16.mxu0 0
    %427 = vmatpush2.bf16.xpose.msra.mxu0 0
    %428 = vmatprep.subr.bf16.mxu0 0
    %429 = vmatpush2.bf16.xpose.msra.mxu0 0
    %430 = vmatprep.mubr.bf16.mxu0 0
    %431 = vmatmul.mubr.bf16.gmra.mxu0 %v393
    %v432 = vpop.f32.mrf.mxu0
    %v433 = vadd.f32 0.0, %v432
    %v434 = vpop.f32.mrf.mxu0
    %v435 = vpop.f32.mrf.mxu0
    %v436 = vadd.f32 0.0, %v435
    %v437 = vpop.f32.mrf.mxu0
    %438 = vdwg.mxu0
    %v441 = vunpack.c.l.b16 %v372
    %v442 = vunpack.c.l.b16 %v373
    %v443 = vpack.c.b16 %v442, %v441
    %v445 = vsel %vm391, %v363, 0
    %v448 = vsel %vm391, %v443, 0
    %450 = vmatprep.subr.bf16.mxu0 0
    %451 = vmatpush1.bf16.xpose.msra.mxu0 0
    %452 = vmatprep.subr.bf16.mxu0 0
    %453 = vmatpush1.bf16.xpose.msra.mxu0 0
    %454 = vmatprep.subr.bf16.mxu0 0
    %455 = vmatpush1.bf16.xpose.msra.mxu0 0
    %456 = vmatprep.subr.bf16.mxu0 0
    %457 = vmatpush1.bf16.xpose.msra.mxu0 0
    %458 = vmatprep.subr.bf16.mxu0 0
    %459 = vmatpush1.bf16.xpose.msra.mxu0 0
    %460 = vmatprep.subr.bf16.mxu0 0
    %461 = vmatpush1.bf16.xpose.msra.mxu0 0
    %462 = vmatprep.subr.bf16.mxu0 0
    %463 = vmatpush1.bf16.xpose.msra.mxu0 0
    %464 = vmatprep.subr.bf16.mxu0 0
    %465 = vmatpush1.bf16.xpose.msra.mxu0 %v448
    %466 = vmatprep.subr.bf16.mxu0 0
    %467 = vmatpush2.bf16.xpose.msra.mxu0 0
    %468 = vmatprep.subr.bf16.mxu0 0
    %469 = vmatpush2.bf16.xpose.msra.mxu0 0
    %470 = vmatprep.subr.bf16.mxu0 0
    %471 = vmatpush2.bf16.xpose.msra.mxu0 0
    %472 = vmatprep.subr.bf16.mxu0 0
    %473 = vmatpush2.bf16.xpose.msra.mxu0 0
    %474 = vmatprep.subr.bf16.mxu0 0
    %475 = vmatpush2.bf16.xpose.msra.mxu0 0
    %476 = vmatprep.subr.bf16.mxu0 0
    %477 = vmatpush2.bf16.xpose.msra.mxu0 0
    %478 = vmatprep.subr.bf16.mxu0 0
    %479 = vmatpush2.bf16.xpose.msra.mxu0 0
    %480 = vmatprep.subr.bf16.mxu0 0
    %481 = vmatpush2.bf16.xpose.msra.mxu0 0
    %482 = vmatprep.mubr.bf16.mxu0 0
    %483 = vmatmul.mubr.bf16.gmra.mxu0 %v445
    %v484 = vpop.f32.mrf.mxu0
    %v485 = vadd.f32 0.0, %v484
    %v486 = vpop.f32.mrf.mxu0
    %v487 = vpop.f32.mrf.mxu0
    %v488 = vadd.f32 0.0, %v487
    %v489 = vpop.f32.mrf.mxu0
    %490 = vdwg.mxu0
    %v493 = vunpack.c.l.b16 %v374
    %v494 = vunpack.c.l.b16 %v375
    %v495 = vpack.c.b16 %v494, %v493
    %v497 = vsel %vm391, %v366, 0
    %v500 = vsel %vm391, %v495, 0
    %502 = vmatprep.subr.bf16.mxu0 0
    %503 = vmatpush1.bf16.xpose.msra.mxu0 0
    %504 = vmatprep.subr.bf16.mxu0 0
    %505 = vmatpush1.bf16.xpose.msra.mxu0 0
    %506 = vmatprep.subr.bf16.mxu0 0
    %507 = vmatpush1.bf16.xpose.msra.mxu0 0
    %508 = vmatprep.subr.bf16.mxu0 0
    %509 = vmatpush1.bf16.xpose.msra.mxu0 0
    %510 = vmatprep.subr.bf16.mxu0 0
    %511 = vmatpush1.bf16.xpose.msra.mxu0 0
    %512 = vmatprep.subr.bf16.mxu0 0
    %513 = vmatpush1.bf16.xpose.msra.mxu0 0
    %514 = vmatprep.subr.bf16.mxu0 0
    %515 = vmatpush1.bf16.xpose.msra.mxu0 0
    %516 = vmatprep.subr.bf16.mxu0 0
    %517 = vmatpush1.bf16.xpose.msra.mxu0 %v500
    %518 = vmatprep.subr.bf16.mxu0 0
    %519 = vmatpush2.bf16.xpose.msra.mxu0 0
    %520 = vmatprep.subr.bf16.mxu0 0
    %521 = vmatpush2.bf16.xpose.msra.mxu0 0
    %522 = vmatprep.subr.bf16.mxu0 0
    %523 = vmatpush2.bf16.xpose.msra.mxu0 0
    %524 = vmatprep.subr.bf16.mxu0 0
    %525 = vmatpush2.bf16.xpose.msra.mxu0 0
    %526 = vmatprep.subr.bf16.mxu0 0
    %527 = vmatpush2.bf16.xpose.msra.mxu0 0
    %528 = vmatprep.subr.bf16.mxu0 0
    %529 = vmatpush2.bf16.xpose.msra.mxu0 0
    %530 = vmatprep.subr.bf16.mxu0 0
    %531 = vmatpush2.bf16.xpose.msra.mxu0 0
    %532 = vmatprep.subr.bf16.mxu0 0
    %533 = vmatpush2.bf16.xpose.msra.mxu0 0
    %534 = vmatprep.mubr.bf16.mxu0 0
    %535 = vmatmul.mubr.bf16.gmra.mxu0 %v497
    %v536 = vpop.f32.mrf.mxu0
    %v537 = vadd.f32 0.0, %v536
    %v538 = vpop.f32.mrf.mxu0
    %v539 = vpop.f32.mrf.mxu0
    %v540 = vadd.f32 0.0, %v539
    %v541 = vpop.f32.mrf.mxu0
    %542 = vdwg.mxu0
    %v545 = vunpack.c.l.b16 %v376
    %v546 = vunpack.c.l.b16 %v377
    %v547 = vpack.c.b16 %v546, %v545
    %v549 = vsel %vm391, %v369, 0
    %v552 = vsel %vm391, %v547, 0
    %554 = vmatprep.subr.bf16.mxu0 0
    %555 = vmatpush1.bf16.xpose.msra.mxu0 0
    %556 = vmatprep.subr.bf16.mxu0 0
    %557 = vmatpush1.bf16.xpose.msra.mxu0 0
    %558 = vmatprep.subr.bf16.mxu0 0
    %559 = vmatpush1.bf16.xpose.msra.mxu0 0
    %560 = vmatprep.subr.bf16.mxu0 0
    %561 = vmatpush1.bf16.xpose.msra.mxu0 0
    %562 = vmatprep.subr.bf16.mxu0 0
    %563 = vmatpush1.bf16.xpose.msra.mxu0 0
    %564 = vmatprep.subr.bf16.mxu0 0
    %565 = vmatpush1.bf16.xpose.msra.mxu0 0
    %566 = vmatprep.subr.bf16.mxu0 0
    %567 = vmatpush1.bf16.xpose.msra.mxu0 0
    %568 = vmatprep.subr.bf16.mxu0 0
    %569 = vmatpush1.bf16.xpose.msra.mxu0 %v552
    %570 = vmatprep.subr.bf16.mxu0 0
    %571 = vmatpush2.bf16.xpose.msra.mxu0 0
    %572 = vmatprep.subr.bf16.mxu0 0
    %573 = vmatpush2.bf16.xpose.msra.mxu0 0
    %574 = vmatprep.subr.bf16.mxu0 0
    %575 = vmatpush2.bf16.xpose.msra.mxu0 0
    %576 = vmatprep.subr.bf16.mxu0 0
    %577 = vmatpush2.bf16.xpose.msra.mxu0 0
    %578 = vmatprep.subr.bf16.mxu0 0
    %579 = vmatpush2.bf16.xpose.msra.mxu0 0
    %580 = vmatprep.subr.bf16.mxu0 0
    %581 = vmatpush2.bf16.xpose.msra.mxu0 0
    %582 = vmatprep.subr.bf16.mxu0 0
    %583 = vmatpush2.bf16.xpose.msra.mxu0 0
    %584 = vmatprep.subr.bf16.mxu0 0
    %585 = vmatpush2.bf16.xpose.msra.mxu0 0
    %586 = vmatprep.mubr.bf16.mxu0 0
    %587 = vmatmul.mubr.bf16.gmra.mxu0 %v549
    %v588 = vpop.f32.mrf.mxu0
    %v589 = vadd.f32 0.0, %v588
    %v590 = vpop.f32.mrf.mxu0
    %v591 = vpop.f32.mrf.mxu0
    %v592 = vadd.f32 0.0, %v591
    %v593 = vpop.f32.mrf.mxu0
    %594 = vdwg.mxu0
    %vm595 = vcmask 130048
    %v596 = vsel %vm595, %v433, -inf
    %597 = vmax.xlane.f32.xlu0 %v596
    %v598 = vpop.xlane.xlu0 %597
    %v599 = vsel %vm595, %v436, -inf
    %600 = vmax.xlane.f32.xlu0 %v599
    %v601 = vpop.xlane.xlu0 %600
    %v602 = vsel %vm595, %v485, -inf
    %603 = vmax.xlane.f32.xlu0 %v602
    %v604 = vpop.xlane.xlu0 %603
    %v605 = vsel %vm595, %v488, -inf
    %606 = vmax.xlane.f32.xlu0 %v605
    %v607 = vpop.xlane.xlu0 %606
    %v608 = vsel %vm595, %v537, -inf
    %609 = vmax.xlane.f32.xlu0 %v608
    %v610 = vpop.xlane.xlu0 %609
    %v611 = vsel %vm595, %v540, -inf
    %612 = vmax.xlane.f32.xlu0 %v611
    %v613 = vpop.xlane.xlu0 %612
    %v614 = vsel %vm595, %v589, -inf
    %615 = vmax.xlane.f32.xlu0 %v614
    %v616 = vpop.xlane.xlu0 %615
    %v617 = vsel %vm595, %v592, -inf
    %618 = vmax.xlane.f32.xlu0 %v617
    %v619 = vpop.xlane.xlu0 %618
    %v620 = vsub.f32 %v433, %v598
    %v621 = vsub.f32 %v436, %v601
    %v622 = vsub.f32 %v485, %v604
    %v623 = vsub.f32 %v488, %v607
    %v624 = vsub.f32 %v537, %v610
    %v625 = vsub.f32 %v540, %v613
    %v626 = vsub.f32 %v589, %v616
    %v627 = vsub.f32 %v592, %v619
    %v628 = vmul.f32 %v620, 1.442695
    %v629 = vpow.pop %v628
    %v630 = vmul.f32 %v621, 1.442695
    %v631 = vpow.pop %v630
    %v632 = vmul.f32 %v622, 1.442695
    %v633 = vpow.pop %v632
    %v634 = vmul.f32 %v623, 1.442695
    %v635 = vpow.pop %v634
    %v636 = vmul.f32 %v624, 1.442695
    %v637 = vpow.pop %v636
    %v638 = vmul.f32 %v625, 1.442695
    %v639 = vpow.pop %v638
    %v640 = vmul.f32 %v626, 1.442695
    %v641 = vpow.pop %v640
    %v642 = vmul.f32 %v627, 1.442695
    %v643 = vpow.pop %v642
    %v644 = vsel %vm595, %v629, 0.0
    %645 = vadd.xlane.f32.xlu0 %v644
    %v646 = vpop.xlane.xlu0 %645
    %v647 = vsel %vm595, %v631, 0.0
    %648 = vadd.xlane.f32.xlu0 %v647
    %v649 = vpop.xlane.xlu0 %648
    %v650 = vsel %vm595, %v633, 0.0
    %651 = vadd.xlane.f32.xlu0 %v650
    %v652 = vpop.xlane.xlu0 %651
    %v653 = vsel %vm595, %v635, 0.0
    %654 = vadd.xlane.f32.xlu0 %v653
    %v655 = vpop.xlane.xlu0 %654
    %v656 = vsel %vm595, %v637, 0.0
    %657 = vadd.xlane.f32.xlu0 %v656
    %v658 = vpop.xlane.xlu0 %657
    %v659 = vsel %vm595, %v639, 0.0
    %660 = vadd.xlane.f32.xlu0 %v659
    %v661 = vpop.xlane.xlu0 %660
    %v662 = vsel %vm595, %v641, 0.0
    %663 = vadd.xlane.f32.xlu0 %v662
    %v664 = vpop.xlane.xlu0 %663
    %v665 = vsel %vm595, %v643, 0.0
    %666 = vadd.xlane.f32.xlu0 %v665
    %v667 = vpop.xlane.xlu0 %666
    %v668 = vrcp.pop %v646
    %v669 = vrcp.pop %v649
    %v670 = vrcp.pop %v652
    %v671 = vrcp.pop %v655
    %v672 = vrcp.pop %v658
    %v673 = vrcp.pop %v661
    %v674 = vrcp.pop %v664
    %v675 = vrcp.pop %v667
    %v676 = vmul.f32 %v629, %v668
    %v677 = vmul.f32 %v631, %v669
    %v678 = vmul.f32 %v633, %v670
    %v679 = vmul.f32 %v635, %v671
    %v680 = vmul.f32 %v637, %v672
    %v681 = vmul.f32 %v639, %v673
    %v682 = vmul.f32 %v641, %v674
    %v683 = vmul.f32 %v643, %v675
    %v684 = vpack.c.bf16 %v677, %v676
    %v685 = vpack.c.bf16 %v679, %v678
    %v686 = vpack.c.bf16 %v681, %v680
    %v687 = vpack.c.bf16 %v683, %v682
    %v692 = vunpack.c.l.b16 %v684
    %v693 = vunpack.c.h.b16 %v684
    %v694 = vunpack.c.l.b16 %v685
    %v695 = vunpack.c.h.b16 %v685
    %v696 = vunpack.c.l.b16 %v686
    %v697 = vunpack.c.h.b16 %v686
    %v698 = vunpack.c.l.b16 %v687
    %v699 = vunpack.c.h.b16 %v687
    %v700 = vpack.c.b16 %v692, %v692
    %v701 = vpack.c.b16 %v693, %v693
    %v702 = vpack.c.b16 %v694, %v694
    %v703 = vpack.c.b16 %v695, %v695
    %v704 = vpack.c.b16 %v696, %v696
    %v705 = vpack.c.b16 %v697, %v697
    %v706 = vpack.c.b16 %v698, %v698
    %v707 = vpack.c.b16 %v699, %v699
    %vm716 = vcmask 125952
    %717 = vst.msk [vmem:[#allocation4] sm:$0xf] %vm716, %v700
    %718 = vst.msk [vmem:[#allocation4 + $0x4] sm:$0xf] %vm716, %v701
    %719 = vst.msk [vmem:[#allocation4 + $0x8] sm:$0xf] %vm716, %v702
    %720 = vst.msk [vmem:[#allocation4 + $0xc] sm:$0xf] %vm716, %v703
    %721 = vst.msk [vmem:[#allocation4 + $0x10] sm:$0xf] %vm716, %v704
    %722 = vst.msk [vmem:[#allocation4 + $0x14] sm:$0xf] %vm716, %v705
    %723 = vst.msk [vmem:[#allocation4 + $0x18] sm:$0xf] %vm716, %v706
    %724 = vst.msk [vmem:[#allocation4 + $0x1c] sm:$0xf] %vm716, %v707
    %v727 = vunpack.c.l.b16 %v378
    %v728 = vunpack.c.l.b16 %v379
    %v729 = vpack.c.b16 %v728, %v727
    %v732 = vsel %vm595, %v684, 0
    %734 = vmatprep.subr.bf16.mxu0 0
    %735 = vmatpush1.bf16.msra.mxu0 0
    %736 = vmatprep.subr.bf16.mxu0 0
    %737 = vmatpush1.bf16.msra.mxu0 0
    %738 = vmatprep.subr.bf16.mxu0 0
    %739 = vmatpush1.bf16.msra.mxu0 0
    %740 = vmatprep.subr.bf16.mxu0 0
    %741 = vmatpush1.bf16.msra.mxu0 0
    %742 = vmatprep.subr.bf16.mxu0 0
    %743 = vmatpush1.bf16.msra.mxu0 0
    %744 = vmatprep.subr.bf16.mxu0 0
    %745 = vmatpush1.bf16.msra.mxu0 0
    %746 = vmatprep.subr.bf16.mxu0 0
    %747 = vmatpush1.bf16.msra.mxu0 0
    %748 = vmatprep.subr.bf16.mxu0 0
    %749 = vmatpush1.bf16.msra.mxu0 %v729
    %750 = vmatprep.subr.bf16.mxu0 0
    %751 = vmatpush2.bf16.msra.mxu0 0
    %752 = vmatprep.subr.bf16.mxu0 0
    %753 = vmatpush2.bf16.msra.mxu0 0
    %754 = vmatprep.subr.bf16.mxu0 0
    %755 = vmatpush2.bf16.msra.mxu0 0
    %756 = vmatprep.subr.bf16.mxu0 0
    %757 = vmatpush2.bf16.msra.mxu0 0
    %758 = vmatprep.subr.bf16.mxu0 0
    %759 = vmatpush2.bf16.msra.mxu0 0
    %760 = vmatprep.subr.bf16.mxu0 0
    %761 = vmatpush2.bf16.msra.mxu0 0
    %762 = vmatprep.subr.bf16.mxu0 0
    %763 = vmatpush2.bf16.msra.mxu0 0
    %764 = vmatprep.subr.bf16.mxu0 0
    %765 = vmatpush2.bf16.msra.mxu0 0
    %766 = vmatprep.mubr.bf16.mxu0 0
    %767 = vmatmul.mubr.bf16.gmra.mxu0 %v732
    %v768 = vpop.f32.mrf.mxu0
    %v769 = vadd.f32 0.0, %v768
    %v770 = vpop.f32.mrf.mxu0
    %v771 = vpop.f32.mrf.mxu0
    %v772 = vadd.f32 0.0, %v771
    %v773 = vpop.f32.mrf.mxu0
    %774 = vdwg.mxu0
    %v777 = vunpack.c.l.b16 %v380
    %v778 = vunpack.c.l.b16 %v381
    %v779 = vpack.c.b16 %v778, %v777
    %v782 = vsel %vm595, %v685, 0
    %784 = vmatprep.subr.bf16.mxu0 0
    %785 = vmatpush1.bf16.msra.mxu0 0
    %786 = vmatprep.subr.bf16.mxu0 0
    %787 = vmatpush1.bf16.msra.mxu0 0
    %788 = vmatprep.subr.bf16.mxu0 0
    %789 = vmatpush1.bf16.msra.mxu0 0
    %790 = vmatprep.subr.bf16.mxu0 0
    %791 = vmatpush1.bf16.msra.mxu0 0
    %792 = vmatprep.subr.bf16.mxu0 0
    %793 = vmatpush1.bf16.msra.mxu0 0
    %794 = vmatprep.subr.bf16.mxu0 0
    %795 = vmatpush1.bf16.msra.mxu0 0
    %796 = vmatprep.subr.bf16.mxu0 0
    %797 = vmatpush1.bf16.msra.mxu0 0
    %798 = vmatprep.subr.bf16.mxu0 0
    %799 = vmatpush1.bf16.msra.mxu0 %v779
    %800 = vmatprep.subr.bf16.mxu0 0
    %801 = vmatpush2.bf16.msra.mxu0 0
    %802 = vmatprep.subr.bf16.mxu0 0
    %803 = vmatpush2.bf16.msra.mxu0 0
    %804 = vmatprep.subr.bf16.mxu0 0
    %805 = vmatpush2.bf16.msra.mxu0 0
    %806 = vmatprep.subr.bf16.mxu0 0
    %807 = vmatpush2.bf16.msra.mxu0 0
    %808 = vmatprep.subr.bf16.mxu0 0
    %809 = vmatpush2.bf16.msra.mxu0 0
    %810 = vmatprep.subr.bf16.mxu0 0
    %811 = vmatpush2.bf16.msra.mxu0 0
    %812 = vmatprep.subr.bf16.mxu0 0
    %813 = vmatpush2.bf16.msra.mxu0 0
    %814 = vmatprep.subr.bf16.mxu0 0
    %815 = vmatpush2.bf16.msra.mxu0 0
    %816 = vmatprep.mubr.bf16.mxu0 0
    %817 = vmatmul.mubr.bf16.gmra.mxu0 %v782
    %v818 = vpop.f32.mrf.mxu0
    %v819 = vadd.f32 0.0, %v818
    %v820 = vpop.f32.mrf.mxu0
    %v821 = vpop.f32.mrf.mxu0
    %v822 = vadd.f32 0.0, %v821
    %v823 = vpop.f32.mrf.mxu0
    %824 = vdwg.mxu0
    %v827 = vunpack.c.l.b16 %v382
    %v828 = vunpack.c.l.b16 %v383
    %v829 = vpack.c.b16 %v828, %v827
    %v832 = vsel %vm595, %v686, 0
    %834 = vmatprep.subr.bf16.mxu0 0
    %835 = vmatpush1.bf16.msra.mxu0 0
    %836 = vmatprep.subr.bf16.mxu0 0
    %837 = vmatpush1.bf16.msra.mxu0 0
    %838 = vmatprep.subr.bf16.mxu0 0
    %839 = vmatpush1.bf16.msra.mxu0 0
    %840 = vmatprep.subr.bf16.mxu0 0
    %841 = vmatpush1.bf16.msra.mxu0 0
    %842 = vmatprep.subr.bf16.mxu0 0
    %843 = vmatpush1.bf16.msra.mxu0 0
    %844 = vmatprep.subr.bf16.mxu0 0
    %845 = vmatpush1.bf16.msra.mxu0 0
    %846 = vmatprep.subr.bf16.mxu0 0
    %847 = vmatpush1.bf16.msra.mxu0 0
    %848 = vmatprep.subr.bf16.mxu0 0
    %849 = vmatpush1.bf16.msra.mxu0 %v829
    %850 = vmatprep.subr.bf16.mxu0 0
    %851 = vmatpush2.bf16.msra.mxu0 0
    %852 = vmatprep.subr.bf16.mxu0 0
    %853 = vmatpush2.bf16.msra.mxu0 0
    %854 = vmatprep.subr.bf16.mxu0 0
    %855 = vmatpush2.bf16.msra.mxu0 0
    %856 = vmatprep.subr.bf16.mxu0 0
    %857 = vmatpush2.bf16.msra.mxu0 0
    %858 = vmatprep.subr.bf16.mxu0 0
    %859 = vmatpush2.bf16.msra.mxu0 0
    %860 = vmatprep.subr.bf16.mxu0 0
    %861 = vmatpush2.bf16.msra.mxu0 0
    %862 = vmatprep.subr.bf16.mxu0 0
    %863 = vmatpush2.bf16.msra.mxu0 0
    %864 = vmatprep.subr.bf16.mxu0 0
    %865 = vmatpush2.bf16.msra.mxu0 0
    %866 = vmatprep.mubr.bf16.mxu0 0
    %867 = vmatmul.mubr.bf16.gmra.mxu0 %v832
    %v868 = vpop.f32.mrf.mxu0
    %v869 = vadd.f32 0.0, %v868
    %v870 = vpop.f32.mrf.mxu0
    %v871 = vpop.f32.mrf.mxu0
    %v872 = vadd.f32 0.0, %v871
    %v873 = vpop.f32.mrf.mxu0
    %874 = vdwg.mxu0
    %v877 = vunpack.c.l.b16 %v384
    %v878 = vunpack.c.l.b16 %v385
    %v879 = vpack.c.b16 %v878, %v877
    %v882 = vsel %vm595, %v687, 0
    %884 = vmatprep.subr.bf16.mxu0 0
    %885 = vmatpush1.bf16.msra.mxu0 0
    %886 = vmatprep.subr.bf16.mxu0 0
    %887 = vmatpush1.bf16.msra.mxu0 0
    %888 = vmatprep.subr.bf16.mxu0 0
    %889 = vmatpush1.bf16.msra.mxu0 0
    %890 = vmatprep.subr.bf16.mxu0 0
    %891 = vmatpush1.bf16.msra.mxu0 0
    %892 = vmatprep.subr.bf16.mxu0 0
    %893 = vmatpush1.bf16.msra.mxu0 0
    %894 = vmatprep.subr.bf16.mxu0 0
    %895 = vmatpush1.bf16.msra.mxu0 0
    %896 = vmatprep.subr.bf16.mxu0 0
    %897 = vmatpush1.bf16.msra.mxu0 0
    %898 = vmatprep.subr.bf16.mxu0 0
    %899 = vmatpush1.bf16.msra.mxu0 %v879
    %900 = vmatprep.subr.bf16.mxu0 0
    %901 = vmatpush2.bf16.msra.mxu0 0
    %902 = vmatprep.subr.bf16.mxu0 0
    %903 = vmatpush2.bf16.msra.mxu0 0
    %904 = vmatprep.subr.bf16.mxu0 0
    %905 = vmatpush2.bf16.msra.mxu0 0
    %906 = vmatprep.subr.bf16.mxu0 0
    %907 = vmatpush2.bf16.msra.mxu0 0
    %908 = vmatprep.subr.bf16.mxu0 0
    %909 = vmatpush2.bf16.msra.mxu0 0
    %910 = vmatprep.subr.bf16.mxu0 0
    %911 = vmatpush2.bf16.msra.mxu0 0
    %912 = vmatprep.subr.bf16.mxu0 0
    %913 = vmatpush2.bf16.msra.mxu0 0
    %914 = vmatprep.subr.bf16.mxu0 0
    %915 = vmatpush2.bf16.msra.mxu0 0
    %916 = vmatprep.mubr.bf16.mxu0 0
    %917 = vmatmul.mubr.bf16.gmra.mxu0 %v882
    %v918 = vpop.f32.mrf.mxu0
    %v919 = vadd.f32 0.0, %v918
    %v920 = vpop.f32.mrf.mxu0
    %v921 = vpop.f32.mrf.mxu0
    %v922 = vadd.f32 0.0, %v921
    %v923 = vpop.f32.mrf.mxu0
    %924 = vdwg.mxu0
    %v925 = vpack.c.bf16 %v772, %v769
    %v926 = vpack.c.bf16 %v822, %v819
    %v927 = vpack.c.bf16 %v872, %v869
    %v928 = vpack.c.bf16 %v922, %v919
    %v929 = vld [vmem:[%s4] sm:$0xf]
    %v930 = vld [vmem:[%s4 + $0x4] sm:$0xf]
    %v931 = vld [vmem:[%s4 + $0x8] sm:$0xf]
    %v932 = vld [vmem:[%s4 + $0xc] sm:$0xf]
    %v934 = vsel %vm391, %v925, 0
    %vm936 = vcmask 1043456
    %v938 = vsel %vm936, %v929, 0
    %940 = vmatprep.subr.bf16.mxu0 0
    %941 = vmatpush1.bf16.msra.mxu0 0
    %942 = vmatprep.subr.bf16.mxu0 0
    %943 = vmatpush1.bf16.msra.mxu0 0
    %944 = vmatprep.subr.bf16.mxu0 0
    %945 = vmatpush1.bf16.msra.mxu0 0
    %946 = vmatprep.subr.bf16.mxu0 0
    %947 = vmatpush1.bf16.msra.mxu0 0
    %948 = vmatprep.subr.bf16.mxu0 0
    %949 = vmatpush1.bf16.msra.mxu0 0
    %950 = vmatprep.subr.bf16.mxu0 0
    %951 = vmatpush1.bf16.msra.mxu0 0
    %952 = vmatprep.subr.bf16.mxu0 0
    %953 = vmatpush1.bf16.msra.mxu0 0
    %954 = vmatprep.subr.bf16.mxu0 0
    %955 = vmatpush1.bf16.msra.mxu0 %v938
    %956 = vmatprep.subr.bf16.mxu0 0
    %957 = vmatpush2.bf16.msra.mxu0 0
    %958 = vmatprep.subr.bf16.mxu0 0
    %959 = vmatpush2.bf16.msra.mxu0 0
    %960 = vmatprep.subr.bf16.mxu0 0
    %961 = vmatpush2.bf16.msra.mxu0 0
    %962 = vmatprep.subr.bf16.mxu0 0
    %963 = vmatpush2.bf16.msra.mxu0 0
    %964 = vmatprep.subr.bf16.mxu0 0
    %965 = vmatpush2.bf16.msra.mxu0 0
    %966 = vmatprep.subr.bf16.mxu0 0
    %967 = vmatpush2.bf16.msra.mxu0 0
    %968 = vmatprep.subr.bf16.mxu0 0
    %969 = vmatpush2.bf16.msra.mxu0 0
    %970 = vmatprep.subr.bf16.mxu0 0
    %971 = vmatpush2.bf16.msra.mxu0 0
    %972 = vmatprep.mubr.bf16.mxu0 0
    %973 = vmatmul.mubr.bf16.gmra.mxu0 %v934
    %v974 = vpop.f32.mrf.mxu0
    %v975 = vadd.f32 0.0, %v974
    %v976 = vpop.f32.mrf.mxu0
    %v977 = vpop.f32.mrf.mxu0
    %v978 = vadd.f32 0.0, %v977
    %v979 = vpop.f32.mrf.mxu0
    %980 = vdwg.mxu0
    %v982 = vsel %vm391, %v926, 0
    %v985 = vsel %vm936, %v930, 0
    %987 = vmatprep.subr.bf16.mxu0 0
    %988 = vmatpush1.bf16.msra.mxu0 0
    %989 = vmatprep.subr.bf16.mxu0 0
    %990 = vmatpush1.bf16.msra.mxu0 0
    %991 = vmatprep.subr.bf16.mxu0 0
    %992 = vmatpush1.bf16.msra.mxu0 0
    %993 = vmatprep.subr.bf16.mxu0 0
    %994 = vmatpush1.bf16.msra.mxu0 0
    %995 = vmatprep.subr.bf16.mxu0 0
    %996 = vmatpush1.bf16.msra.mxu0 0
    %997 = vmatprep.subr.bf16.mxu0 0
    %998 = vmatpush1.bf16.msra.mxu0 0
    %999 = vmatprep.subr.bf16.mxu0 0
    %1000 = vmatpush1.bf16.msra.mxu0 0
    %1001 = vmatprep.subr.bf16.mxu0 0
    %1002 = vmatpush1.bf16.msra.mxu0 %v985
    %1003 = vmatprep.subr.bf16.mxu0 0
    %1004 = vmatpush2.bf16.msra.mxu0 0
    %1005 = vmatprep.subr.bf16.mxu0 0
    %1006 = vmatpush2.bf16.msra.mxu0 0
    %1007 = vmatprep.subr.bf16.mxu0 0
    %1008 = vmatpush2.bf16.msra.mxu0 0
    %1009 = vmatprep.subr.bf16.mxu0 0
    %1010 = vmatpush2.bf16.msra.mxu0 0
    %1011 = vmatprep.subr.bf16.mxu0 0
    %1012 = vmatpush2.bf16.msra.mxu0 0
    %1013 = vmatprep.subr.bf16.mxu0 0
    %1014 = vmatpush2.bf16.msra.mxu0 0
    %1015 = vmatprep.subr.bf16.mxu0 0
    %1016 = vmatpush2.bf16.msra.mxu0 0
    %1017 = vmatprep.subr.bf16.mxu0 0
    %1018 = vmatpush2.bf16.msra.mxu0 0
    %1019 = vmatprep.mubr.bf16.mxu0 0
    %1020 = vmatmul.mubr.bf16.gmra.mxu0 %v982
    %v1021 = vpop.f32.mrf.mxu0
    %v1022 = vadd.f32 0.0, %v1021
    %v1023 = vpop.f32.mrf.mxu0
    %v1024 = vpop.f32.mrf.mxu0
    %v1025 = vadd.f32 0.0, %v1024
    %v1026 = vpop.f32.mrf.mxu0
    %1027 = vdwg.mxu0
    %v1029 = vsel %vm391, %v927, 0
    %v1032 = vsel %vm936, %v931, 0
    %1034 = vmatprep.subr.bf16.mxu0 0
    %1035 = vmatpush1.bf16.msra.mxu0 0
    %1036 = vmatprep.subr.bf16.mxu0 0
    %1037 = vmatpush1.bf16.msra.mxu0 0
    %1038 = vmatprep.subr.bf16.mxu0 0
    %1039 = vmatpush1.bf16.msra.mxu0 0
    %1040 = vmatprep.subr.bf16.mxu0 0
    %1041 = vmatpush1.bf16.msra.mxu0 0
    %1042 = vmatprep.subr.bf16.mxu0 0
    %1043 = vmatpush1.bf16.msra.mxu0 0
    %1044 = vmatprep.subr.bf16.mxu0 0
    %1045 = vmatpush1.bf16.msra.mxu0 0
    %1046 = vmatprep.subr.bf16.mxu0 0
    %1047 = vmatpush1.bf16.msra.mxu0 0
    %1048 = vmatprep.subr.bf16.mxu0 0
    %1049 = vmatpush1.bf16.msra.mxu0 %v1032
    %1050 = vmatprep.subr.bf16.mxu0 0
    %1051 = vmatpush2.bf16.msra.mxu0 0
    %1052 = vmatprep.subr.bf16.mxu0 0
    %1053 = vmatpush2.bf16.msra.mxu0 0
    %1054 = vmatprep.subr.bf16.mxu0 0
    %1055 = vmatpush2.bf16.msra.mxu0 0
    %1056 = vmatprep.subr.bf16.mxu0 0
    %1057 = vmatpush2.bf16.msra.mxu0 0
    %1058 = vmatprep.subr.bf16.mxu0 0
    %1059 = vmatpush2.bf16.msra.mxu0 0
    %1060 = vmatprep.subr.bf16.mxu0 0
    %1061 = vmatpush2.bf16.msra.mxu0 0
    %1062 = vmatprep.subr.bf16.mxu0 0
    %1063 = vmatpush2.bf16.msra.mxu0 0
    %1064 = vmatprep.subr.bf16.mxu0 0
    %1065 = vmatpush2.bf16.msra.mxu0 0
    %1066 = vmatprep.mubr.bf16.mxu0 0
    %1067 = vmatmul.mubr.bf16.gmra.mxu0 %v1029
    %v1068 = vpop.f32.mrf.mxu0
    %v1069 = vadd.f32 0.0, %v1068
    %v1070 = vpop.f32.mrf.mxu0
    %v1071 = vpop.f32.mrf.mxu0
    %v1072 = vadd.f32 0.0, %v1071
    %v1073 = vpop.f32.mrf.mxu0
    %1074 = vdwg.mxu0
    %v1076 = vsel %vm391, %v928, 0
    %v1079 = vsel %vm936, %v932, 0
    %1081 = vmatprep.subr.bf16.mxu0 0
    %1082 = vmatpush1.bf16.msra.mxu0 0
    %1083 = vmatprep.subr.bf16.mxu0 0
    %1084 = vmatpush1.bf16.msra.mxu0 0
    %1085 = vmatprep.subr.bf16.mxu0 0
    %1086 = vmatpush1.bf16.msra.mxu0 0
    %1087 = vmatprep.subr.bf16.mxu0 0
    %1088 = vmatpush1.bf16.msra.mxu0 0
    %1089 = vmatprep.subr.bf16.mxu0 0
    %1090 = vmatpush1.bf16.msra.mxu0 0
    %1091 = vmatprep.subr.bf16.mxu0 0
    %1092 = vmatpush1.bf16.msra.mxu0 0
    %1093 = vmatprep.subr.bf16.mxu0 0
    %1094 = vmatpush1.bf16.msra.mxu0 0
    %1095 = vmatprep.subr.bf16.mxu0 0
    %1096 = vmatpush1.bf16.msra.mxu0 %v1079
    %1097 = vmatprep.subr.bf16.mxu0 0
    %1098 = vmatpush2.bf16.msra.mxu0 0
    %1099 = vmatprep.subr.bf16.mxu0 0
    %1100 = vmatpush2.bf16.msra.mxu0 0
    %1101 = vmatprep.subr.bf16.mxu0 0
    %1102 = vmatpush2.bf16.msra.mxu0 0
    %1103 = vmatprep.subr.bf16.mxu0 0
    %1104 = vmatpush2.bf16.msra.mxu0 0
    %1105 = vmatprep.subr.bf16.mxu0 0
    %1106 = vmatpush2.bf16.msra.mxu0 0
    %1107 = vmatprep.subr.bf16.mxu0 0
    %1108 = vmatpush2.bf16.msra.mxu0 0
    %1109 = vmatprep.subr.bf16.mxu0 0
    %1110 = vmatpush2.bf16.msra.mxu0 0
    %1111 = vmatprep.subr.bf16.mxu0 0
    %1112 = vmatpush2.bf16.msra.mxu0 0
    %1113 = vmatprep.mubr.bf16.mxu0 0
    %1114 = vmatmul.mubr.bf16.gmra.mxu0 %v1076
    %v1115 = vpop.f32.mrf.mxu0
    %v1116 = vadd.f32 0.0, %v1115
    %v1117 = vpop.f32.mrf.mxu0
    %v1118 = vpop.f32.mrf.mxu0
    %v1119 = vadd.f32 0.0, %v1118
    %v1120 = vpop.f32.mrf.mxu0
    %1121 = vdwg.mxu0
    %v1122 = vsel %vm51, %v975, 0.0
    %v1123 = vsel %vm51, %v1022, 0.0
    %v1124 = vadd.f32 %v1122, %v1123
    %v1125 = vsel %vm51, %v1069, 0.0
    %v1126 = vadd.f32 %v1124, %v1125
    %v1127 = vsel %vm51, %v1116, 0.0
    %v1128 = vadd.f32 %v1126, %v1127
    %v1129 = vsel %vm51, %v978, 0.0
    %v1130 = vsel %vm51, %v1025, 0.0
    %v1131 = vadd.f32 %v1129, %v1130
    %v1132 = vsel %vm51, %v1072, 0.0
    %v1133 = vadd.f32 %v1131, %v1132
    %v1134 = vsel %vm51, %v1119, 0.0
    %v1135 = vadd.f32 %v1133, %v1134
    %v1136 = vld [vmem:[%s5] sm:$0x1]
    %v1138 = vlaneseq
    %v1139 = vshrl.u32 %v1138, 7
    %v1140 = vsub.s32 0, %v1139
    %v1141 = vrot.slane %v1136, %v1140
    %v1143 = vadd.f32 %v1128, %v1141
    %v1144 = vadd.f32 %v1135, %v1141
    %1145 = vst.msk [vmem:[#allocation2] sm:$0xff] %vm51, %v1143
    %1146 = vst.msk [vmem:[#allocation2 + $0x8] sm:$0xff] %vm51, %v1144
    // Predicated region
    $region26: #{tpu_custom_call.1} parent=1 // pred_check
      _
    $region27: #{tpu_custom_call.1} parent=1 // pred_check_branch
      %1148 = sbr.rel (0) target = $region29
    $region28: #{tpu_custom_call.1} parent=1 // pred_region
      %s1150 = ssub.s32 256, 256
      %1151 = vsyncadd [#allocation3], %s1150
      %s1152 = sshll.u32 [#allocation2], 4
      %s1153 = int_to_ptr.vmem [resolvable:$true] %s1152
      %1158 = dma.vmem_to_hbm [thread:$0]  %s1153, 256, %s6, [#allocation3], 128, 128, 8
    $region29: #{tpu_custom_call.1} parent=1 // pred_fallthru
      _
    // Predicated region
    $region30: #{tpu_custom_call.1} parent=1 // pred_check
      _
    $region31: #{tpu_custom_call.1} parent=1 // pred_check_branch
      %1160 = sbr.rel (0) target = $region33
    $region32: #{tpu_custom_call.1} parent=1 // pred_region
      %s1162 = ssub.s32 512, 512
      %1163 = vsyncadd [#allocation5], %s1162
      %s1164 = sshll.u32 [#allocation4], 4
      %s1165 = int_to_ptr.vmem [resolvable:$true] %s1164
      %1170 = dma.vmem_to_hbm [thread:$0]  %s1165, 512, %s7, [#allocation5], 64, 64, 4
    $region33: #{tpu_custom_call.1} parent=1 // pred_fallthru
      _
    // Predicated region
    $region34: #{tpu_custom_call.1} parent=1 // pred_check
      _
    $region35: #{tpu_custom_call.1} parent=1 // pred_check_branch
      %1172 = sbr.rel (0) target = $region37
    $region36: #{tpu_custom_call.1} parent=1 // pred_region
      %1173 = dma.done [#allocation3], 256
    $region37: #{tpu_custom_call.1} parent=1 // pred_fallthru
      _
    // Predicated region
    $region38: #{tpu_custom_call.1} parent=1 // pred_check
      _
    $region39: #{tpu_custom_call.1} parent=1 // pred_check_branch
      %1175 = sbr.rel (0) target = $region41
    $region40: #{tpu_custom_call.1} parent=1 // pred_region
      %1176 = dma.done [#allocation5], 512
    $region41: #{tpu_custom_call.1} parent=1 // pred_fallthru
      _
    %1177 = vsyncpa [#allocation3], 1
    %1178 = vsyncpa [#allocation5], 1

// kernel: tpu_custom_call.1
$region0: #{tpu_custom_call.1}
  #allocation0 [shape = 'u32[]', space=smem, size = 0x4, offset = 0x4, fixed_abs, tag = 'smem constant byte address 0x4 - core index']
  #allocation1 [shape = 'u32[144,128]{1,0:T(1,128)}', space=vmem, size = 0x12000, scoped, tag = 'internal scratch']
  %s0 = inlined_call_operand.vmem [shape: bf16[16,32], index: 0, kind: input, shape index: {}]
  %s1 = inlined_call_operand.vmem [shape: bf16[4,16,8], index: 1, kind: input, shape index: {}]
  %s2 = inlined_call_operand.vmem [shape: bf16[4,16,8], index: 2, kind: input, shape index: {}]
  %s3 = inlined_call_operand.vmem [shape: bf16[32,32], index: 3, kind: input, shape index: {}]
  %s4 = inlined_call_operand.vmem [shape: bf16[4,8,32], index: 4, kind: input, shape index: {}]
  %s5 = inlined_call_operand.vmem [shape: f32[1,32], index: 5, kind: input, shape index: {}]
  %s6 = inlined_call_operand.hbm [shape: f32[16,32], index: 6, kind: output, shape index: {0}]
  %s7 = inlined_call_operand.hbm [shape: bf16[4,16,16], index: 7, kind: output, shape index: {1}]
  %8 = xla_tuple %s6, %s7
  %s9 = sld [smem:[#allocation0]]
  $region42: #{tpu_custom_call.1} parent=0
    _
  %s11 = ssub.s32 1, %s9
  %s12 = scalar_select 0, %s11, %s9
  $region1: #{tpu_custom_call.1} parent=0
    #allocation2 [shape = 'u8[8192]{0}', space=vmem, size = 0x2000, scoped, tag = 'output window, operand 0, single buffered']
    #allocation3 [shape = 's32[1]{0}', space=sflag, size = 0x4, scoped, tag = 'scoped memory for tpu_custom_call.1']
    #allocation4 [shape = 'u8[16384]{0}', space=vmem, size = 0x4000, scoped, tag = 'output window, operand 1, single buffered']
    #allocation5 [shape = 's32[1]{0}', space=sflag, size = 0x4, scoped, tag = 'scoped memory for tpu_custom_call.1']
    %13 = vsyncpa [#allocation3], 0
    %14 = vsyncpa [#allocation5], 0
    // Predicated region
    $region2: #{tpu_custom_call.1} parent=1 // pred_check
      _
    $region3: #{tpu_custom_call.1} parent=1 // pred_check_branch
      %16 = sbr.rel (0) target = $region5
    $region4: #{tpu_custom_call.1} parent=1 // pred_region
      _
    $region5: #{tpu_custom_call.1} parent=1 // pred_fallthru
      _
    // Predicated region
    $region6: #{tpu_custom_call.1} parent=1 // pred_check
      _
    $region7: #{tpu_custom_call.1} parent=1 // pred_check_branch
      %18 = sbr.rel (0) target = $region9
    $region8: #{tpu_custom_call.1} parent=1 // pred_region
      _
    $region9: #{tpu_custom_call.1} parent=1 // pred_fallthru
      _
    // Predicated region
    $region10: #{tpu_custom_call.1} parent=1 // pred_check
      _
    $region11: #{tpu_custom_call.1} parent=1 // pred_check_branch
      %20 = sbr.rel (0) target = $region13
    $region12: #{tpu_custom_call.1} parent=1 // pred_region
      _
    $region13: #{tpu_custom_call.1} parent=1 // pred_fallthru
      _
    // Predicated region
    $region14: #{tpu_custom_call.1} parent=1 // pred_check
      _
    $region15: #{tpu_custom_call.1} parent=1 // pred_check_branch
      %22 = sbr.rel (0) target = $region17
    $region16: #{tpu_custom_call.1} parent=1 // pred_region
      _
    $region17: #{tpu_custom_call.1} parent=1 // pred_fallthru
      _
    // Predicated region
    $region18: #{tpu_custom_call.1} parent=1 // pred_check
      _
    $region19: #{tpu_custom_call.1} parent=1 // pred_check_branch
      %24 = sbr.rel (0) target = $region21
    $region20: #{tpu_custom_call.1} parent=1 // pred_region
      _
    $region21: #{tpu_custom_call.1} parent=1 // pred_fallthru
      _
    // Predicated region
    $region22: #{tpu_custom_call.1} parent=1 // pred_check
      _
    $region23: #{tpu_custom_call.1} parent=1 // pred_check_branch
      %26 = sbr.rel (0) target = $region25
    $region24: #{tpu_custom_call.1} parent=1 // pred_region
      _
    $region25: #{tpu_custom_call.1} parent=1 // pred_fallthru
      _
    %v28 = vld [vmem:[%s0] sm:$0xf]
    %v29 = vld [vmem:[%s0 + $0x4] sm:$0xf]
    %v30 = vld [vmem:[%s3] sm:$0xf]
    %v31 = vld [vmem:[%s3 + $0x4] sm:$0xf]
    %v32 = vld [vmem:[%s3 + $0x8] sm:$0xf]
    %v33 = vld [vmem:[%s3 + $0xc] sm:$0xf]
    %v36 = vunpack.c.l.b16 %v28
    %v37 = vunpack.c.l.b16 %v29
    %v38 = vpack.c.b16 %v37, %v36
    %v43 = vunpack.c.l.b16 %v30
    %v44 = vunpack.c.l.b16 %v31
    %v45 = vunpack.c.l.b16 %v32
    %v46 = vunpack.c.l.b16 %v33
    %v47 = vpack.c.b16 %v44, %v43
    %v48 = vpack.c.b16 %v46, %v45
    %vm51 = vcmask 261120
    %v53 = vsel %vm51, %v38, 0
    %55 = vmatprep.subr.bf16.mxu0 0
    %56 = vmatpush1.bf16.msra.mxu0 0
    %57 = vmatprep.subr.bf16.mxu0 0
    %58 = vmatpush1.bf16.msra.mxu0 0
    %59 = vmatprep.subr.bf16.mxu0 0
    %60 = vmatpush1.bf16.msra.mxu0 0
    %61 = vmatprep.subr.bf16.mxu0 0
    %62 = vmatpush1.bf16.msra.mxu0 0
    %63 = vmatprep.subr.bf16.mxu0 0
    %64 = vmatpush1.bf16.msra.mxu0 0
    %65 = vmatprep.subr.bf16.mxu0 0
    %66 = vmatpush1.bf16.msra.mxu0 0
    %67 = vmatprep.subr.bf16.mxu0 0
    %68 = vmatpush1.bf16.msra.mxu0 %v48
    %69 = vmatprep.subr.bf16.mxu0 0
    %70 = vmatpush1.bf16.msra.mxu0 %v47
    %71 = vmatprep.subr.bf16.mxu0 0
    %72 = vmatpush2.bf16.msra.mxu0 0
    %73 = vmatprep.subr.bf16.mxu0 0
    %74 = vmatpush2.bf16.msra.mxu0 0
    %75 = vmatprep.subr.bf16.mxu0 0
    %76 = vmatpush2.bf16.msra.mxu0 0
    %77 = vmatprep.subr.bf16.mxu0 0
    %78 = vmatpush2.bf16.msra.mxu0 0
    %79 = vmatprep.subr.bf16.mxu0 0
    %80 = vmatpush2.bf16.msra.mxu0 0
    %81 = vmatprep.subr.bf16.mxu0 0
    %82 = vmatpush2.bf16.msra.mxu0 0
    %83 = vmatprep.subr.bf16.mxu0 0
    %84 = vmatpush2.bf16.msra.mxu0 0
    %85 = vmatprep.subr.bf16.mxu0 0
    %86 = vmatpush2.bf16.msra.mxu0 0
    %87 = vmatprep.mubr.bf16.mxu0 0
    %88 = vmatmul.mubr.bf16.gmra.mxu0 %v53
    %v89 = vpop.f32.mrf.mxu0
    %v90 = vadd.f32 0.0, %v89
    %v91 = vpop.f32.mrf.mxu0
    %v92 = vpop.f32.mrf.mxu0
    %v93 = vadd.f32 0.0, %v92
    %v94 = vpop.f32.mrf.mxu0
    %95 = vdwg.mxu0
    %v96 = vpack.c.bf16 %v93, %v90
    %98 = vrot.lane.b32.xlu0 %v96, 120
    %v99 = vpop.permute.xlu0 %98
    %100 = vrot.lane.b32.xlu0 %v96, 112
    %v101 = vpop.permute.xlu0 %100
    %102 = vrot.lane.b32.xlu0 %v96, 104
    %v103 = vpop.permute.xlu0 %102
    %v106 = vpack.i.b16 %v99, %v96
    %v108 = vshrl.u32 %v96, 16
    %v109 = vshrl.u32 %v99, 16
    %v110 = vpack.i.b16 %v109, %v108
    %v114 = vpack.i.b16 %v103, %v101
    %v116 = vshrl.u32 %v101, 16
    %v117 = vshrl.u32 %v103, 16
    %v118 = vpack.i.b16 %v117, %v116
    %v121 = vpack.i.b16 0, 0
    %v123 = vshrl.u32 0, 16
    %v124 = vpack.i.b16 %v123, %v123
    %v126 = vcombine.high %v106, %v121
    %v128 = vunpack.c.l.s4 1983009808
    %v129 = vunpack.c.0.s8 %v128
    %v130 = vlaneseq
    %v131 = vshrl.u32 %v130, 7
    %v132 = vsub.s32 %v129, %v131
    %v133 = vrot.slane %v106, %v132
    %v135 = vunpack.c.l.s4 1983009808
    %v136 = vunpack.c.0.s8 %v135
    %v137 = vlaneseq
    %v138 = vshrl.u32 %v137, 7
    %v139 = vsub.s32 %v136, %v138
    %v140 = vrot.slane %v126, %v139
    %v141 = vcombine.high %v114, %v121
    %v143 = vunpack.c.l.s4 1983009808
    %v144 = vunpack.c.0.s8 %v143
    %v145 = vlaneseq
    %v146 = vshrl.u32 %v145, 7
    %v147 = vsub.s32 %v144, %v146
    %v148 = vrot.slane %v114, %v147
    %v150 = vunpack.c.l.s4 1983009808
    %v151 = vunpack.c.0.s8 %v150
    %v152 = vlaneseq
    %v153 = vshrl.u32 %v152, 7
    %v154 = vsub.s32 %v151, %v153
    %v155 = vrot.slane %v141, %v154
    %v156 = vcombine.low %v133, %v148
    %v157 = vcombine.high %v133, %v148
    %v159 = vunpack.c.l.s4 1934713408
    %v160 = vunpack.c.0.s8 %v159
    %v161 = vlaneseq
    %v162 = vshrl.u32 %v161, 7
    %v163 = vsub.s32 %v160, %v162
    %v164 = vrot.slane %v156, %v163
    %v166 = vunpack.c.l.s4 1934713408
    %v167 = vunpack.c.0.s8 %v166
    %v168 = vlaneseq
    %v169 = vshrl.u32 %v168, 7
    %v170 = vsub.s32 %v167, %v169
    %v171 = vrot.slane %v157, %v170
    %v172 = vcombine.low %v140, %v155
    %v173 = vcombine.high %v140, %v155
    %v175 = vunpack.c.l.s4 1934713408
    %v176 = vunpack.c.0.s8 %v175
    %v177 = vlaneseq
    %v178 = vshrl.u32 %v177, 7
    %v179 = vsub.s32 %v176, %v178
    %v180 = vrot.slane %v172, %v179
    %v182 = vunpack.c.l.s4 1934713408
    %v183 = vunpack.c.0.s8 %v182
    %v184 = vlaneseq
    %v185 = vshrl.u32 %v184, 7
    %v186 = vsub.s32 %v183, %v185
    %v187 = vrot.slane %v173, %v186
    %v188 = vcombine.high %v164, 0
    %v189 = vcombine.high %v171, 0
    %v190 = vcombine.high %v180, 0
    %v191 = vcombine.high %v187, 0
    %v192 = vcombine.high %v110, %v124
    %v194 = vunpack.c.l.s4 1983009808
    %v195 = vunpack.c.0.s8 %v194
    %v196 = vlaneseq
    %v197 = vshrl.u32 %v196, 7
    %v198 = vsub.s32 %v195, %v197
    %v199 = vrot.slane %v110, %v198
    %v201 = vunpack.c.l.s4 1983009808
    %v202 = vunpack.c.0.s8 %v201
    %v203 = vlaneseq
    %v204 = vshrl.u32 %v203, 7
    %v205 = vsub.s32 %v202, %v204
    %v206 = vrot.slane %v192, %v205
    %v207 = vcombine.high %v118, %v124
    %v209 = vunpack.c.l.s4 1983009808
    %v210 = vunpack.c.0.s8 %v209
    %v211 = vlaneseq
    %v212 = vshrl.u32 %v211, 7
    %v213 = vsub.s32 %v210, %v212
    %v214 = vrot.slane %v118, %v213
    %v216 = vunpack.c.l.s4 1983009808
    %v217 = vunpack.c.0.s8 %v216
    %v218 = vlaneseq
    %v219 = vshrl.u32 %v218, 7
    %v220 = vsub.s32 %v217, %v219
    %v221 = vrot.slane %v207, %v220
    %v222 = vcombine.low %v199, %v214
    %v223 = vcombine.high %v199, %v214
    %v225 = vunpack.c.l.s4 1934713408
    %v226 = vunpack.c.0.s8 %v225
    %v227 = vlaneseq
    %v228 = vshrl.u32 %v227, 7
    %v229 = vsub.s32 %v226, %v228
    %v230 = vrot.slane %v222, %v229
    %v232 = vunpack.c.l.s4 1934713408
    %v233 = vunpack.c.0.s8 %v232
    %v234 = vlaneseq
    %v235 = vshrl.u32 %v234, 7
    %v236 = vsub.s32 %v233, %v235
    %v237 = vrot.slane %v223, %v236
    %v238 = vcombine.low %v206, %v221
    %v239 = vcombine.high %v206, %v221
    %v241 = vunpack.c.l.s4 1934713408
    %v242 = vunpack.c.0.s8 %v241
    %v243 = vlaneseq
    %v244 = vshrl.u32 %v243, 7
    %v245 = vsub.s32 %v242, %v244
    %v246 = vrot.slane %v238, %v245
    %v248 = vunpack.c.l.s4 1934713408
    %v249 = vunpack.c.0.s8 %v248
    %v250 = vlaneseq
    %v251 = vshrl.u32 %v250, 7
    %v252 = vsub.s32 %v249, %v251
    %v253 = vrot.slane %v239, %v252
    %v254 = vcombine.high %v230, 0
    %v255 = vcombine.high %v237, 0
    %v256 = vcombine.high %v246, 0
    %v257 = vcombine.high %v253, 0
    %v258 = vcombine.low %v164, %v171
    %v260 = vunpack.c.l.s4 1983009808
    %v261 = vunpack.c.0.s8 %v260
    %v262 = vlaneseq
    %v263 = vshrl.u32 %v262, 7
    %v264 = vsub.s32 %v261, %v263
    %v265 = vrot.slane %v258, %v264
    %v266 = vcombine.low %v188, %v189
    %v268 = vunpack.c.l.s4 1983009808
    %v269 = vunpack.c.0.s8 %v268
    %v270 = vlaneseq
    %v271 = vshrl.u32 %v270, 7
    %v272 = vsub.s32 %v269, %v271
    %v273 = vrot.slane %v266, %v272
    %v274 = vcombine.low %v180, %v187
    %v276 = vunpack.c.l.s4 1983009808
    %v277 = vunpack.c.0.s8 %v276
    %v278 = vlaneseq
    %v279 = vshrl.u32 %v278, 7
    %v280 = vsub.s32 %v277, %v279
    %v281 = vrot.slane %v274, %v280
    %v282 = vcombine.low %v190, %v191
    %v284 = vunpack.c.l.s4 1983009808
    %v285 = vunpack.c.0.s8 %v284
    %v286 = vlaneseq
    %v287 = vshrl.u32 %v286, 7
    %v288 = vsub.s32 %v285, %v287
    %v289 = vrot.slane %v282, %v288
    %v290 = vcombine.low %v265, %v273
    %v292 = vunpack.c.l.s4 1934713408
    %v293 = vunpack.c.0.s8 %v292
    %v294 = vlaneseq
    %v295 = vshrl.u32 %v294, 7
    %v296 = vsub.s32 %v293, %v295
    %v297 = vrot.slane %v290, %v296
    %v298 = vcombine.low %v281, %v289
    %v300 = vunpack.c.l.s4 1934713408
    %v301 = vunpack.c.0.s8 %v300
    %v302 = vlaneseq
    %v303 = vshrl.u32 %v302, 7
    %v304 = vsub.s32 %v301, %v303
    %v305 = vrot.slane %v298, %v304
    %v306 = vcombine.low %v297, %v305
    %v307 = vcombine.high %v297, %v305
    %v308 = vcombine.low %v230, %v237
    %v310 = vunpack.c.l.s4 1983009808
    %v311 = vunpack.c.0.s8 %v310
    %v312 = vlaneseq
    %v313 = vshrl.u32 %v312, 7
    %v314 = vsub.s32 %v311, %v313
    %v315 = vrot.slane %v308, %v314
    %v316 = vcombine.low %v254, %v255
    %v318 = vunpack.c.l.s4 1983009808
    %v319 = vunpack.c.0.s8 %v318
    %v320 = vlaneseq
    %v321 = vshrl.u32 %v320, 7
    %v322 = vsub.s32 %v319, %v321
    %v323 = vrot.slane %v316, %v322
    %v324 = vcombine.low %v246, %v253
    %v326 = vunpack.c.l.s4 1983009808
    %v327 = vunpack.c.0.s8 %v326
    %v328 = vlaneseq
    %v329 = vshrl.u32 %v328, 7
    %v330 = vsub.s32 %v327, %v329
    %v331 = vrot.slane %v324, %v330
    %v332 = vcombine.low %v256, %v257
    %v334 = vunpack.c.l.s4 1983009808
    %v335 = vunpack.c.0.s8 %v334
    %v336 = vlaneseq
    %v337 = vshrl.u32 %v336, 7
    %v338 = vsub.s32 %v335, %v337
    %v339 = vrot.slane %v332, %v338
    %v340 = vcombine.low %v315, %v323
    %v342 = vunpack.c.l.s4 1934713408
    %v343 = vunpack.c.0.s8 %v342
    %v344 = vlaneseq
    %v345 = vshrl.u32 %v344, 7
    %v346 = vsub.s32 %v343, %v345
    %v347 = vrot.slane %v340, %v346
    %v348 = vcombine.low %v331, %v339
    %v350 = vunpack.c.l.s4 1934713408
    %v351 = vunpack.c.0.s8 %v350
    %v352 = vlaneseq
    %v353 = vshrl.u32 %v352, 7
    %v354 = vsub.s32 %v351, %v353
    %v355 = vrot.slane %v348, %v354
    %v356 = vcombine.low %v347, %v355
    %v357 = vcombine.high %v347, %v355
    %v360 = vpack.i.b16 %v356, %v306
    %v361 = vshrl.u32 %v306, 16
    %v362 = vshrl.u32 %v356, 16
    %v363 = vpack.i.b16 %v362, %v361
    %v366 = vpack.i.b16 %v357, %v307
    %v367 = vshrl.u32 %v307, 16
    %v368 = vshrl.u32 %v357, 16
    %v369 = vpack.i.b16 %v368, %v367
    %v370 = vld [vmem:[%s1] sm:$0xf]
    %v371 = vld [vmem:[%s1 + $0x4] sm:$0xf]
    %v372 = vld [vmem:[%s1 + $0x8] sm:$0xf]
    %v373 = vld [vmem:[%s1 + $0xc] sm:$0xf]
    %v374 = vld [vmem:[%s1 + $0x10] sm:$0xf]
    %v375 = vld [vmem:[%s1 + $0x14] sm:$0xf]
    %v376 = vld [vmem:[%s1 + $0x18] sm:$0xf]
    %v377 = vld [vmem:[%s1 + $0x1c] sm:$0xf]
    %v378 = vld [vmem:[%s2] sm:$0xf]
    %v379 = vld [vmem:[%s2 + $0x4] sm:$0xf]
    %v380 = vld [vmem:[%s2 + $0x8] sm:$0xf]
    %v381 = vld [vmem:[%s2 + $0xc] sm:$0xf]
    %v382 = vld [vmem:[%s2 + $0x10] sm:$0xf]
    %v383 = vld [vmem:[%s2 + $0x14] sm:$0xf]
    %v384 = vld [vmem:[%s2 + $0x18] sm:$0xf]
    %v385 = vld [vmem:[%s2 + $0x1c] sm:$0xf]
    %v388 = vunpack.c.l.b16 %v370
    %v389 = vunpack.c.l.b16 %v371
    %v390 = vpack.c.b16 %v389, %v388
    %vm391 = vcmask 64512
    %v393 = vsel %vm391, %v360, 0
    %v396 = vsel %vm391, %v390, 0
    %398 = vmatprep.subr.bf16.mxu0 0
    %399 = vmatpush1.bf16.xpose.msra.mxu0 0
    %400 = vmatprep.subr.bf16.mxu0 0
    %401 = vmatpush1.bf16.xpose.msra.mxu0 0
    %402 = vmatprep.subr.bf16.mxu0 0
    %403 = vmatpush1.bf16.xpose.msra.mxu0 0
    %404 = vmatprep.subr.bf16.mxu0 0
    %405 = vmatpush1.bf16.xpose.msra.mxu0 0
    %406 = vmatprep.subr.bf16.mxu0 0
    %407 = vmatpush1.bf16.xpose.msra.mxu0 0
    %408 = vmatprep.subr.bf16.mxu0 0
    %409 = vmatpush1.bf16.xpose.msra.mxu0 0
    %410 = vmatprep.subr.bf16.mxu0 0
    %411 = vmatpush1.bf16.xpose.msra.mxu0 0
    %412 = vmatprep.subr.bf16.mxu0 0
    %413 = vmatpush1.bf16.xpose.msra.mxu0 %v396
    %414 = vmatprep.subr.bf16.mxu0 0
    %415 = vmatpush2.bf16.xpose.msra.mxu0 0
    %416 = vmatprep.subr.bf16.mxu0 0
    %417 = vmatpush2.bf16.xpose.msra.mxu0 0
    %418 = vmatprep.subr.bf16.mxu0 0
    %419 = vmatpush2.bf16.xpose.msra.mxu0 0
    %420 = vmatprep.subr.bf16.mxu0 0
    %421 = vmatpush2.bf16.xpose.msra.mxu0 0
    %422 = vmatprep.subr.bf16.mxu0 0
    %423 = vmatpush2.bf16.xpose.msra.mxu0 0
    %424 = vmatprep.subr.bf16.mxu0 0
    %425 = vmatpush2.bf16.xpose.msra.mxu0 0
    %426 = vmatprep.subr.bf16.mxu0 0
    %427 = vmatpush2.bf16.xpose.msra.mxu0 0
    %428 = vmatprep.subr.bf16.mxu0 0
    %429 = vmatpush2.bf16.xpose.msra.mxu0 0
    %430 = vmatprep.mubr.bf16.mxu0 0
    %431 = vmatmul.mubr.bf16.gmra.mxu0 %v393
    %v432 = vpop.f32.mrf.mxu0
    %v433 = vadd.f32 0.0, %v432
    %v434 = vpop.f32.mrf.mxu0
    %v435 = vpop.f32.mrf.mxu0
    %v436 = vadd.f32 0.0, %v435
    %v437 = vpop.f32.mrf.mxu0
    %438 = vdwg.mxu0
    %v441 = vunpack.c.l.b16 %v372
    %v442 = vunpack.c.l.b16 %v373
    %v443 = vpack.c.b16 %v442, %v441
    %v445 = vsel %vm391, %v363, 0
    %v448 = vsel %vm391, %v443, 0
    %450 = vmatprep.subr.bf16.mxu0 0
    %451 = vmatpush1.bf16.xpose.msra.mxu0 0
    %452 = vmatprep.subr.bf16.mxu0 0
    %453 = vmatpush1.bf16.xpose.msra.mxu0 0
    %454 = vmatprep.subr.bf16.mxu0 0
    %455 = vmatpush1.bf16.xpose.msra.mxu0 0
    %456 = vmatprep.subr.bf16.mxu0 0
    %457 = vmatpush1.bf16.xpose.msra.mxu0 0
    %458 = vmatprep.subr.bf16.mxu0 0
    %459 = vmatpush1.bf16.xpose.msra.mxu0 0
    %460 = vmatprep.subr.bf16.mxu0 0
    %461 = vmatpush1.bf16.xpose.msra.mxu0 0
    %462 = vmatprep.subr.bf16.mxu0 0
    %463 = vmatpush1.bf16.xpose.msra.mxu0 0
    %464 = vmatprep.subr.bf16.mxu0 0
    %465 = vmatpush1.bf16.xpose.msra.mxu0 %v448
    %466 = vmatprep.subr.bf16.mxu0 0
    %467 = vmatpush2.bf16.xpose.msra.mxu0 0
    %468 = vmatprep.subr.bf16.mxu0 0
    %469 = vmatpush2.bf16.xpose.msra.mxu0 0
    %470 = vmatprep.subr.bf16.mxu0 0
    %471 = vmatpush2.bf16.xpose.msra.mxu0 0
    %472 = vmatprep.subr.bf16.mxu0 0
    %473 = vmatpush2.bf16.xpose.msra.mxu0 0
    %474 = vmatprep.subr.bf16.mxu0 0
    %475 = vmatpush2.bf16.xpose.msra.mxu0 0
    %476 = vmatprep.subr.bf16.mxu0 0
    %477 = vmatpush2.bf16.xpose.msra.mxu0 0
    %478 = vmatprep.subr.bf16.mxu0 0
    %479 = vmatpush2.bf16.xpose.msra.mxu0 0
    %480 = vmatprep.subr.bf16.mxu0 0
    %481 = vmatpush2.bf16.xpose.msra.mxu0 0
    %482 = vmatprep.mubr.bf16.mxu0 0
    %483 = vmatmul.mubr.bf16.gmra.mxu0 %v445
    %v484 = vpop.f32.mrf.mxu0
    %v485 = vadd.f32 0.0, %v484
    %v486 = vpop.f32.mrf.mxu0
    %v487 = vpop.f32.mrf.mxu0
    %v488 = vadd.f32 0.0, %v487
    %v489 = vpop.f32.mrf.mxu0
    %490 = vdwg.mxu0
    %v493 = vunpack.c.l.b16 %v374
    %v494 = vunpack.c.l.b16 %v375
    %v495 = vpack.c.b16 %v494, %v493
    %v497 = vsel %vm391, %v366, 0
    %v500 = vsel %vm391, %v495, 0
    %502 = vmatprep.subr.bf16.mxu0 0
    %503 = vmatpush1.bf16.xpose.msra.mxu0 0
    %504 = vmatprep.subr.bf16.mxu0 0
    %505 = vmatpush1.bf16.xpose.msra.mxu0 0
    %506 = vmatprep.subr.bf16.mxu0 0
    %507 = vmatpush1.bf16.xpose.msra.mxu0 0
    %508 = vmatprep.subr.bf16.mxu0 0
    %509 = vmatpush1.bf16.xpose.msra.mxu0 0
    %510 = vmatprep.subr.bf16.mxu0 0
    %511 = vmatpush1.bf16.xpose.msra.mxu0 0
    %512 = vmatprep.subr.bf16.mxu0 0
    %513 = vmatpush1.bf16.xpose.msra.mxu0 0
    %514 = vmatprep.subr.bf16.mxu0 0
    %515 = vmatpush1.bf16.xpose.msra.mxu0 0
    %516 = vmatprep.subr.bf16.mxu0 0
    %517 = vmatpush1.bf16.xpose.msra.mxu0 %v500
    %518 = vmatprep.subr.bf16.mxu0 0
    %519 = vmatpush2.bf16.xpose.msra.mxu0 0
    %520 = vmatprep.subr.bf16.mxu0 0
    %521 = vmatpush2.bf16.xpose.msra.mxu0 0
    %522 = vmatprep.subr.bf16.mxu0 0
    %523 = vmatpush2.bf16.xpose.msra.mxu0 0
    %524 = vmatprep.subr.bf16.mxu0 0
    %525 = vmatpush2.bf16.xpose.msra.mxu0 0
    %526 = vmatprep.subr.bf16.mxu0 0
    %527 = vmatpush2.bf16.xpose.msra.mxu0 0
    %528 = vmatprep.subr.bf16.mxu0 0
    %529 = vmatpush2.bf16.xpose.msra.mxu0 0
    %530 = vmatprep.subr.bf16.mxu0 0
    %531 = vmatpush2.bf16.xpose.msra.mxu0 0
    %532 = vmatprep.subr.bf16.mxu0 0
    %533 = vmatpush2.bf16.xpose.msra.mxu0 0
    %534 = vmatprep.mubr.bf16.mxu0 0
    %535 = vmatmul.mubr.bf16.gmra.mxu0 %v497
    %v536 = vpop.f32.mrf.mxu0
    %v537 = vadd.f32 0.0, %v536
    %v538 = vpop.f32.mrf.mxu0
    %v539 = vpop.f32.mrf.mxu0
    %v540 = vadd.f32 0.0, %v539
    %v541 = vpop.f32.mrf.mxu0
    %542 = vdwg.mxu0
    %v545 = vunpack.c.l.b16 %v376
    %v546 = vunpack.c.l.b16 %v377
    %v547 = vpack.c.b16 %v546, %v545
    %v549 = vsel %vm391, %v369, 0
    %v552 = vsel %vm391, %v547, 0
    %554 = vmatprep.subr.bf16.mxu0 0
    %555 = vmatpush1.bf16.xpose.msra.mxu0 0
    %556 = vmatprep.subr.bf16.mxu0 0
    %557 = vmatpush1.bf16.xpose.msra.mxu0 0
    %558 = vmatprep.subr.bf16.mxu0 0
    %559 = vmatpush1.bf16.xpose.msra.mxu0 0
    %560 = vmatprep.subr.bf16.mxu0 0
    %561 = vmatpush1.bf16.xpose.msra.mxu0 0
    %562 = vmatprep.subr.bf16.mxu0 0
    %563 = vmatpush1.bf16.xpose.msra.mxu0 0
    %564 = vmatprep.subr.bf16.mxu0 0
    %565 = vmatpush1.bf16.xpose.msra.mxu0 0
    %566 = vmatprep.subr.bf16.mxu0 0
    %567 = vmatpush1.bf16.xpose.msra.mxu0 0
    %568 = vmatprep.subr.bf16.mxu0 0
    %569 = vmatpush1.bf16.xpose.msra.mxu0 %v552
    %570 = vmatprep.subr.bf16.mxu0 0
    %571 = vmatpush2.bf16.xpose.msra.mxu0 0
    %572 = vmatprep.subr.bf16.mxu0 0
    %573 = vmatpush2.bf16.xpose.msra.mxu0 0
    %574 = vmatprep.subr.bf16.mxu0 0
    %575 = vmatpush2.bf16.xpose.msra.mxu0 0
    %576 = vmatprep.subr.bf16.mxu0 0
    %577 = vmatpush2.bf16.xpose.msra.mxu0 0
    %578 = vmatprep.subr.bf16.mxu0 0
    %579 = vmatpush2.bf16.xpose.msra.mxu0 0
    %580 = vmatprep.subr.bf16.mxu0 0
    %581 = vmatpush2.bf16.xpose.msra.mxu0 0
    %582 = vmatprep.subr.bf16.mxu0 0
    %583 = vmatpush2.bf16.xpose.msra.mxu0 0
    %584 = vmatprep.subr.bf16.mxu0 0
    %585 = vmatpush2.bf16.xpose.msra.mxu0 0
    %586 = vmatprep.mubr.bf16.mxu0 0
    %587 = vmatmul.mubr.bf16.gmra.mxu0 %v549
    %v588 = vpop.f32.mrf.mxu0
    %v589 = vadd.f32 0.0, %v588
    %v590 = vpop.f32.mrf.mxu0
    %v591 = vpop.f32.mrf.mxu0
    %v592 = vadd.f32 0.0, %v591
    %v593 = vpop.f32.mrf.mxu0
    %594 = vdwg.mxu0
    %vm595 = vcmask 130048
    %v596 = vsel %vm595, %v433, -inf
    %597 = vmax.xlane.f32.xlu0 %v596
    %v598 = vpop.xlane.xlu0 %597
    %v599 = vsel %vm595, %v436, -inf
    %600 = vmax.xlane.f32.xlu0 %v599
    %v601 = vpop.xlane.xlu0 %600
    %v602 = vsel %vm595, %v485, -inf
    %603 = vmax.xlane.f32.xlu0 %v602
    %v604 = vpop.xlane.xlu0 %603
    %v605 = vsel %vm595, %v488, -inf
    %606 = vmax.xlane.f32.xlu0 %v605
    %v607 = vpop.xlane.xlu0 %606
    %v608 = vsel %vm595, %v537, -inf
    %609 = vmax.xlane.f32.xlu0 %v608
    %v610 = vpop.xlane.xlu0 %609
    %v611 = vsel %vm595, %v540, -inf
    %612 = vmax.xlane.f32.xlu0 %v611
    %v613 = vpop.xlane.xlu0 %612
    %v614 = vsel %vm595, %v589, -inf
    %615 = vmax.xlane.f32.xlu0 %v614
    %v616 = vpop.xlane.xlu0 %615
    %v617 = vsel %vm595, %v592, -inf
    %618 = vmax.xlane.f32.xlu0 %v617
    %v619 = vpop.xlane.xlu0 %618
    %v620 = vsub.f32 %v433, %v598
    %v621 = vsub.f32 %v436, %v601
    %v622 = vsub.f32 %v485, %v604
    %v623 = vsub.f32 %v488, %v607
    %v624 = vsub.f32 %v537, %v610
    %v625 = vsub.f32 %v540, %v613
    %v626 = vsub.f32 %v589, %v616
    %v627 = vsub.f32 %v592, %v619
    %v628 = vmul.f32 %v620, 1.442695
    %v629 = vpow.pop %v628
    %v630 = vmul.f32 %v621, 1.442695
    %v631 = vpow.pop %v630
    %v632 = vmul.f32 %v622, 1.442695
    %v633 = vpow.pop %v632
    %v634 = vmul.f32 %v623, 1.442695
    %v635 = vpow.pop %v634
    %v636 = vmul.f32 %v624, 1.442695
    %v637 = vpow.pop %v636
    %v638 = vmul.f32 %v625, 1.442695
    %v639 = vpow.pop %v638
    %v640 = vmul.f32 %v626, 1.442695
    %v641 = vpow.pop %v640
    %v642 = vmul.f32 %v627, 1.442695
    %v643 = vpow.pop %v642
    %v644 = vsel %vm595, %v629, 0.0
    %645 = vadd.xlane.f32.xlu0 %v644
    %v646 = vpop.xlane.xlu0 %645
    %v647 = vsel %vm595, %v631, 0.0
    %648 = vadd.xlane.f32.xlu0 %v647
    %v649 = vpop.xlane.xlu0 %648
    %v650 = vsel %vm595, %v633, 0.0
    %651 = vadd.xlane.f32.xlu0 %v650
    %v652 = vpop.xlane.xlu0 %651
    %v653 = vsel %vm595, %v635, 0.0
    %654 = vadd.xlane.f32.xlu0 %v653
    %v655 = vpop.xlane.xlu0 %654
    %v656 = vsel %vm595, %v637, 0.0
    %657 = vadd.xlane.f32.xlu0 %v656
    %v658 = vpop.xlane.xlu0 %657
    %v659 = vsel %vm595, %v639, 0.0
    %660 = vadd.xlane.f32.xlu0 %v659
    %v661 = vpop.xlane.xlu0 %660
    %v662 = vsel %vm595, %v641, 0.0
    %663 = vadd.xlane.f32.xlu0 %v662
    %v664 = vpop.xlane.xlu0 %663
    %v665 = vsel %vm595, %v643, 0.0
    %666 = vadd.xlane.f32.xlu0 %v665
    %v667 = vpop.xlane.xlu0 %666
    %v668 = vrcp.pop %v646
    %v669 = vrcp.pop %v649
    %v670 = vrcp.pop %v652
    %v671 = vrcp.pop %v655
    %v672 = vrcp.pop %v658
    %v673 = vrcp.pop %v661
    %v674 = vrcp.pop %v664
    %v675 = vrcp.pop %v667
    %v676 = vmul.f32 %v629, %v668
    %v677 = vmul.f32 %v631, %v669
    %v678 = vmul.f32 %v633, %v670
    %v679 = vmul.f32 %v635, %v671
    %v680 = vmul.f32 %v637, %v672
    %v681 = vmul.f32 %v639, %v673
    %v682 = vmul.f32 %v641, %v674
    %v683 = vmul.f32 %v643, %v675
    %v684 = vpack.c.bf16 %v677, %v676
    %v685 = vpack.c.bf16 %v679, %v678
    %v686 = vpack.c.bf16 %v681, %v680
    %v687 = vpack.c.bf16 %v683, %v682
    %v692 = vunpack.c.l.b16 %v684
    %v693 = vunpack.c.h.b16 %v684
    %v694 = vunpack.c.l.b16 %v685
    %v695 = vunpack.c.h.b16 %v685
    %v696 = vunpack.c.l.b16 %v686
    %v697 = vunpack.c.h.b16 %v686
    %v698 = vunpack.c.l.b16 %v687
    %v699 = vunpack.c.h.b16 %v687
    %v700 = vpack.c.b16 %v692, %v692
    %v701 = vpack.c.b16 %v693, %v693
    %v702 = vpack.c.b16 %v694, %v694
    %v703 = vpack.c.b16 %v695, %v695
    %v704 = vpack.c.b16 %v696, %v696
    %v705 = vpack.c.b16 %v697, %v697
    %v706 = vpack.c.b16 %v698, %v698
    %v707 = vpack.c.b16 %v699, %v699
    %vm716 = vcmask 125952
    %717 = vst.msk [vmem:[#allocation4] sm:$0xf] %vm716, %v700
    %718 = vst.msk [vmem:[#allocation4 + $0x4] sm:$0xf] %vm716, %v701
    %719 = vst.msk [vmem:[#allocation4 + $0x8] sm:$0xf] %vm716, %v702
    %720 = vst.msk [vmem:[#allocation4 + $0xc] sm:$0xf] %vm716, %v703
    %721 = vst.msk [vmem:[#allocation4 + $0x10] sm:$0xf] %vm716, %v704
    %722 = vst.msk [vmem:[#allocation4 + $0x14] sm:$0xf] %vm716, %v705
    %723 = vst.msk [vmem:[#allocation4 + $0x18] sm:$0xf] %vm716, %v706
    %724 = vst.msk [vmem:[#allocation4 + $0x1c] sm:$0xf] %vm716, %v707
    %v727 = vunpack.c.l.b16 %v378
    %v728 = vunpack.c.l.b16 %v379
    %v729 = vpack.c.b16 %v728, %v727
    %v732 = vsel %vm595, %v684, 0
    %734 = vmatprep.subr.bf16.mxu0 0
    %735 = vmatpush1.bf16.msra.mxu0 0
    %736 = vmatprep.subr.bf16.mxu0 0
    %737 = vmatpush1.bf16.msra.mxu0 0
    %738 = vmatprep.subr.bf16.mxu0 0
    %739 = vmatpush1.bf16.msra.mxu0 0
    %740 = vmatprep.subr.bf16.mxu0 0
    %741 = vmatpush1.bf16.msra.mxu0 0
    %742 = vmatprep.subr.bf16.mxu0 0
    %743 = vmatpush1.bf16.msra.mxu0 0
    %744 = vmatprep.subr.bf16.mxu0 0
    %745 = vmatpush1.bf16.msra.mxu0 0
    %746 = vmatprep.subr.bf16.mxu0 0
    %747 = vmatpush1.bf16.msra.mxu0 0
    %748 = vmatprep.subr.bf16.mxu0 0
    %749 = vmatpush1.bf16.msra.mxu0 %v729
    %750 = vmatprep.subr.bf16.mxu0 0
    %751 = vmatpush2.bf16.msra.mxu0 0
    %752 = vmatprep.subr.bf16.mxu0 0
    %753 = vmatpush2.bf16.msra.mxu0 0
    %754 = vmatprep.subr.bf16.mxu0 0
    %755 = vmatpush2.bf16.msra.mxu0 0
    %756 = vmatprep.subr.bf16.mxu0 0
    %757 = vmatpush2.bf16.msra.mxu0 0
    %758 = vmatprep.subr.bf16.mxu0 0
    %759 = vmatpush2.bf16.msra.mxu0 0
    %760 = vmatprep.subr.bf16.mxu0 0
    %761 = vmatpush2.bf16.msra.mxu0 0
    %762 = vmatprep.subr.bf16.mxu0 0
    %763 = vmatpush2.bf16.msra.mxu0 0
    %764 = vmatprep.subr.bf16.mxu0 0
    %765 = vmatpush2.bf16.msra.mxu0 0
    %766 = vmatprep.mubr.bf16.mxu0 0
    %767 = vmatmul.mubr.bf16.gmra.mxu0 %v732
    %v768 = vpop.f32.mrf.mxu0
    %v769 = vadd.f32 0.0, %v768
    %v770 = vpop.f32.mrf.mxu0
    %v771 = vpop.f32.mrf.mxu0
    %v772 = vadd.f32 0.0, %v771
    %v773 = vpop.f32.mrf.mxu0
    %774 = vdwg.mxu0
    %v777 = vunpack.c.l.b16 %v380
    %v778 = vunpack.c.l.b16 %v381
    %v779 = vpack.c.b16 %v778, %v777
    %v782 = vsel %vm595, %v685, 0
    %784 = vmatprep.subr.bf16.mxu0 0
    %785 = vmatpush1.bf16.msra.mxu0 0
    %786 = vmatprep.subr.bf16.mxu0 0
    %787 = vmatpush1.bf16.msra.mxu0 0
    %788 = vmatprep.subr.bf16.mxu0 0
    %789 = vmatpush1.bf16.msra.mxu0 0
    %790 = vmatprep.subr.bf16.mxu0 0
    %791 = vmatpush1.bf16.msra.mxu0 0
    %792 = vmatprep.subr.bf16.mxu0 0
    %793 = vmatpush1.bf16.msra.mxu0 0
    %794 = vmatprep.subr.bf16.mxu0 0
    %795 = vmatpush1.bf16.msra.mxu0 0
    %796 = vmatprep.subr.bf16.mxu0 0
    %797 = vmatpush1.bf16.msra.mxu0 0
    %798 = vmatprep.subr.bf16.mxu0 0
    %799 = vmatpush1.bf16.msra.mxu0 %v779
    %800 = vmatprep.subr.bf16.mxu0 0
    %801 = vmatpush2.bf16.msra.mxu0 0
    %802 = vmatprep.subr.bf16.mxu0 0
    %803 = vmatpush2.bf16.msra.mxu0 0
    %804 = vmatprep.subr.bf16.mxu0 0
    %805 = vmatpush2.bf16.msra.mxu0 0
    %806 = vmatprep.subr.bf16.mxu0 0
    %807 = vmatpush2.bf16.msra.mxu0 0
    %808 = vmatprep.subr.bf16.mxu0 0
    %809 = vmatpush2.bf16.msra.mxu0 0
    %810 = vmatprep.subr.bf16.mxu0 0
    %811 = vmatpush2.bf16.msra.mxu0 0
    %812 = vmatprep.subr.bf16.mxu0 0
    %813 = vmatpush2.bf16.msra.mxu0 0
    %814 = vmatprep.subr.bf16.mxu0 0
    %815 = vmatpush2.bf16.msra.mxu0 0
    %816 = vmatprep.mubr.bf16.mxu0 0
    %817 = vmatmul.mubr.bf16.gmra.mxu0 %v782
    %v818 = vpop.f32.mrf.mxu0
    %v819 = vadd.f32 0.0, %v818
    %v820 = vpop.f32.mrf.mxu0
    %v821 = vpop.f32.mrf.mxu0
    %v822 = vadd.f32 0.0, %v821
    %v823 = vpop.f32.mrf.mxu0
    %824 = vdwg.mxu0
    %v827 = vunpack.c.l.b16 %v382
    %v828 = vunpack.c.l.b16 %v383
    %v829 = vpack.c.b16 %v828, %v827
    %v832 = vsel %vm595, %v686, 0
    %834 = vmatprep.subr.bf16.mxu0 0
    %835 = vmatpush1.bf16.msra.mxu0 0
    %836 = vmatprep.subr.bf16.mxu0 0
    %837 = vmatpush1.bf16.msra.mxu0 0
    %838 = vmatprep.subr.bf16.mxu0 0
    %839 = vmatpush1.bf16.msra.mxu0 0
    %840 = vmatprep.subr.bf16.mxu0 0
    %841 = vmatpush1.bf16.msra.mxu0 0
    %842 = vmatprep.subr.bf16.mxu0 0
    %843 = vmatpush1.bf16.msra.mxu0 0
    %844 = vmatprep.subr.bf16.mxu0 0
    %845 = vmatpush1.bf16.msra.mxu0 0
    %846 = vmatprep.subr.bf16.mxu0 0
    %847 = vmatpush1.bf16.msra.mxu0 0
    %848 = vmatprep.subr.bf16.mxu0 0
    %849 = vmatpush1.bf16.msra.mxu0 %v829
    %850 = vmatprep.subr.bf16.mxu0 0
    %851 = vmatpush2.bf16.msra.mxu0 0
    %852 = vmatprep.subr.bf16.mxu0 0
    %853 = vmatpush2.bf16.msra.mxu0 0
    %854 = vmatprep.subr.bf16.mxu0 0
    %855 = vmatpush2.bf16.msra.mxu0 0
    %856 = vmatprep.subr.bf16.mxu0 0
    %857 = vmatpush2.bf16.msra.mxu0 0
    %858 = vmatprep.subr.bf16.mxu0 0
    %859 = vmatpush2.bf16.msra.mxu0 0
    %860 = vmatprep.subr.bf16.mxu0 0
    %861 = vmatpush2.bf16.msra.mxu0 0
    %862 = vmatprep.subr.bf16.mxu0 0
    %863 = vmatpush2.bf16.msra.mxu0 0
    %864 = vmatprep.subr.bf16.mxu0 0
    %865 = vmatpush2.bf16.msra.mxu0 0
    %866 = vmatprep.mubr.bf16.mxu0 0
    %867 = vmatmul.mubr.bf16.gmra.mxu0 %v832
    %v868 = vpop.f32.mrf.mxu0
    %v869 = vadd.f32 0.0, %v868
    %v870 = vpop.f32.mrf.mxu0
    %v871 = vpop.f32.mrf.mxu0
    %v872 = vadd.f32 0.0, %v871
    %v873 = vpop.f32.mrf.mxu0
    %874 = vdwg.mxu0
    %v877 = vunpack.c.l.b16 %v384
    %v878 = vunpack.c.l.b16 %v385
    %v879 = vpack.c.b16 %v878, %v877
    %v882 = vsel %vm595, %v687, 0
    %884 = vmatprep.subr.bf16.mxu0 0
    %885 = vmatpush1.bf16.msra.mxu0 0
    %886 = vmatprep.subr.bf16.mxu0 0
    %887 = vmatpush1.bf16.msra.mxu0 0
    %888 = vmatprep.subr.bf16.mxu0 0
    %889 = vmatpush1.bf16.msra.mxu0 0
    %890 = vmatprep.subr.bf16.mxu0 0
    %891 = vmatpush1.bf16.msra.mxu0 0
    %892 = vmatprep.subr.bf16.mxu0 0
    %893 = vmatpush1.bf16.msra.mxu0 0
    %894 = vmatprep.subr.bf16.mxu0 0
    %895 = vmatpush1.bf16.msra.mxu0 0
    %896 = vmatprep.subr.bf16.mxu0 0
    %897 = vmatpush1.bf16.msra.mxu0 0
    %898 = vmatprep.subr.bf16.mxu0 0
    %899 = vmatpush1.bf16.msra.mxu0 %v879
    %900 = vmatprep.subr.bf16.mxu0 0
    %901 = vmatpush2.bf16.msra.mxu0 0
    %902 = vmatprep.subr.bf16.mxu0 0
    %903 = vmatpush2.bf16.msra.mxu0 0
    %904 = vmatprep.subr.bf16.mxu0 0
    %905 = vmatpush2.bf16.msra.mxu0 0
    %906 = vmatprep.subr.bf16.mxu0 0
    %907 = vmatpush2.bf16.msra.mxu0 0
    %908 = vmatprep.subr.bf16.mxu0 0
    %909 = vmatpush2.bf16.msra.mxu0 0
    %910 = vmatprep.subr.bf16.mxu0 0
    %911 = vmatpush2.bf16.msra.mxu0 0
    %912 = vmatprep.subr.bf16.mxu0 0
    %913 = vmatpush2.bf16.msra.mxu0 0
    %914 = vmatprep.subr.bf16.mxu0 0
    %915 = vmatpush2.bf16.msra.mxu0 0
    %916 = vmatprep.mubr.bf16.mxu0 0
    %917 = vmatmul.mubr.bf16.gmra.mxu0 %v882
    %v918 = vpop.f32.mrf.mxu0
    %v919 = vadd.f32 0.0, %v918
    %v920 = vpop.f32.mrf.mxu0
    %v921 = vpop.f32.mrf.mxu0
    %v922 = vadd.f32 0.0, %v921
    %v923 = vpop.f32.mrf.mxu0
    %924 = vdwg.mxu0
    %v925 = vpack.c.bf16 %v772, %v769
    %v926 = vpack.c.bf16 %v822, %v819
    %v927 = vpack.c.bf16 %v872, %v869
    %v928 = vpack.c.bf16 %v922, %v919
    %v929 = vld [vmem:[%s4] sm:$0xf]
    %v930 = vld [vmem:[%s4 + $0x4] sm:$0xf]
    %v931 = vld [vmem:[%s4 + $0x8] sm:$0xf]
    %v932 = vld [vmem:[%s4 + $0xc] sm:$0xf]
    %v934 = vsel %vm391, %v925, 0
    %vm936 = vcmask 1043456
    %v938 = vsel %vm936, %v929, 0
    %940 = vmatprep.subr.bf16.mxu0 0
    %941 = vmatpush1.bf16.msra.mxu0 0
    %942 = vmatprep.subr.bf16.mxu0 0
    %943 = vmatpush1.bf16.msra.mxu0 0
    %944 = vmatprep.subr.bf16.mxu0 0
    %945 = vmatpush1.bf16.msra.mxu0 0
    %946 = vmatprep.subr.bf16.mxu0 0
    %947 = vmatpush1.bf16.msra.mxu0 0
    %948 = vmatprep.subr.bf16.mxu0 0
    %949 = vmatpush1.bf16.msra.mxu0 0
    %950 = vmatprep.subr.bf16.mxu0 0
    %951 = vmatpush1.bf16.msra.mxu0 0
    %952 = vmatprep.subr.bf16.mxu0 0
    %953 = vmatpush1.bf16.msra.mxu0 0
    %954 = vmatprep.subr.bf16.mxu0 0
    %955 = vmatpush1.bf16.msra.mxu0 %v938
    %956 = vmatprep.subr.bf16.mxu0 0
    %957 = vmatpush2.bf16.msra.mxu0 0
    %958 = vmatprep.subr.bf16.mxu0 0
    %959 = vmatpush2.bf16.msra.mxu0 0
    %960 = vmatprep.subr.bf16.mxu0 0
    %961 = vmatpush2.bf16.msra.mxu0 0
    %962 = vmatprep.subr.bf16.mxu0 0
    %963 = vmatpush2.bf16.msra.mxu0 0
    %964 = vmatprep.subr.bf16.mxu0 0
    %965 = vmatpush2.bf16.msra.mxu0 0
    %966 = vmatprep.subr.bf16.mxu0 0
    %967 = vmatpush2.bf16.msra.mxu0 0
    %968 = vmatprep.subr.bf16.mxu0 0
    %969 = vmatpush2.bf16.msra.mxu0 0
    %970 = vmatprep.subr.bf16.mxu0 0
    %971 = vmatpush2.bf16.msra.mxu0 0
    %972 = vmatprep.mubr.bf16.mxu0 0
    %973 = vmatmul.mubr.bf16.gmra.mxu0 %v934
    %v974 = vpop.f32.mrf.mxu0
    %v975 = vadd.f32 0.0, %v974
    %v976 = vpop.f32.mrf.mxu0
    %v977 = vpop.f32.mrf.mxu0
    %v978 = vadd.f32 0.0, %v977
    %v979 = vpop.f32.mrf.mxu0
    %980 = vdwg.mxu0
    %v982 = vsel %vm391, %v926, 0
    %v985 = vsel %vm936, %v930, 0
    %987 = vmatprep.subr.bf16.mxu0 0
    %988 = vmatpush1.bf16.msra.mxu0 0
    %989 = vmatprep.subr.bf16.mxu0 0
    %990 = vmatpush1.bf16.msra.mxu0 0
    %991 = vmatprep.subr.bf16.mxu0 0
    %992 = vmatpush1.bf16.msra.mxu0 0
    %993 = vmatprep.subr.bf16.mxu0 0
    %994 = vmatpush1.bf16.msra.mxu0 0
    %995 = vmatprep.subr.bf16.mxu0 0
    %996 = vmatpush1.bf16.msra.mxu0 0
    %997 = vmatprep.subr.bf16.mxu0 0
    %998 = vmatpush1.bf16.msra.mxu0 0
    %999 = vmatprep.subr.bf16.mxu0 0
    %1000 = vmatpush1.bf16.msra.mxu0 0
    %1001 = vmatprep.subr.bf16.mxu0 0
    %1002 = vmatpush1.bf16.msra.mxu0 %v985
    %1003 = vmatprep.subr.bf16.mxu0 0
    %1004 = vmatpush2.bf16.msra.mxu0 0
    %1005 = vmatprep.subr.bf16.mxu0 0
    %1006 = vmatpush2.bf16.msra.mxu0 0
    %1007 = vmatprep.subr.bf16.mxu0 0
    %1008 = vmatpush2.bf16.msra.mxu0 0
    %1009 = vmatprep.subr.bf16.mxu0 0
    %1010 = vmatpush2.bf16.msra.mxu0 0
    %1011 = vmatprep.subr.bf16.mxu0 0
    %1012 = vmatpush2.bf16.msra.mxu0 0
    %1013 = vmatprep.subr.bf16.mxu0 0
    %1014 = vmatpush2.bf16.msra.mxu0 0
    %1015 = vmatprep.subr.bf16.mxu0 0
    %1016 = vmatpush2.bf16.msra.mxu0 0
    %1017 = vmatprep.subr.bf16.mxu0 0
    %1018 = vmatpush2.bf16.msra.mxu0 0
    %1019 = vmatprep.mubr.bf16.mxu0 0
    %1020 = vmatmul.mubr.bf16.gmra.mxu0 %v982
    %v1021 = vpop.f32.mrf.mxu0
    %v1022 = vadd.f32 0.0, %v1021
    %v1023 = vpop.f32.mrf.mxu0
    %v1024 = vpop.f32.mrf.mxu0
    %v1025 = vadd.f32 0.0, %v1024
    %v1026 = vpop.f32.mrf.mxu0
    %1027 = vdwg.mxu0
    %v1029 = vsel %vm391, %v927, 0
    %v1032 = vsel %vm936, %v931, 0
    %1034 = vmatprep.subr.bf16.mxu0 0
    %1035 = vmatpush1.bf16.msra.mxu0 0
    %1036 = vmatprep.subr.bf16.mxu0 0
    %1037 = vmatpush1.bf16.msra.mxu0 0
    %1038 = vmatprep.subr.bf16.mxu0 0
    %1039 = vmatpush1.bf16.msra.mxu0 0
    %1040 = vmatprep.subr.bf16.mxu0 0
    %1041 = vmatpush1.bf16.msra.mxu0 0
    %1042 = vmatprep.subr.bf16.mxu0 0
    %1043 = vmatpush1.bf16.msra.mxu0 0
    %1044 = vmatprep.subr.bf16.mxu0 0
    %1045 = vmatpush1.bf16.msra.mxu0 0
    %1046 = vmatprep.subr.bf16.mxu0 0
    %1047 = vmatpush1.bf16.msra.mxu0 0
    %1048 = vmatprep.subr.bf16.mxu0 0
    %1049 = vmatpush1.bf16.msra.mxu0 %v1032
    %1050 = vmatprep.subr.bf16.mxu0 0
    %1051 = vmatpush2.bf16.msra.mxu0 0
    %1052 = vmatprep.subr.bf16.mxu0 0
    %1053 = vmatpush2.bf16.msra.mxu0 0
    %1054 = vmatprep.subr.bf16.mxu0 0
    %1055 = vmatpush2.bf16.msra.mxu0 0
    %1056 = vmatprep.subr.bf16.mxu0 0
    %1057 = vmatpush2.bf16.msra.mxu0 0
    %1058 = vmatprep.subr.bf16.mxu0 0
    %1059 = vmatpush2.bf16.msra.mxu0 0
    %1060 = vmatprep.subr.bf16.mxu0 0
    %1061 = vmatpush2.bf16.msra.mxu0 0
    %1062 = vmatprep.subr.bf16.mxu0 0
    %1063 = vmatpush2.bf16.msra.mxu0 0
    %1064 = vmatprep.subr.bf16.mxu0 0
    %1065 = vmatpush2.bf16.msra.mxu0 0
    %1066 = vmatprep.mubr.bf16.mxu0 0
    %1067 = vmatmul.mubr.bf16.gmra.mxu0 %v1029
    %v1068 = vpop.f32.mrf.mxu0
    %v1069 = vadd.f32 0.0, %v1068
    %v1070 = vpop.f32.mrf.mxu0
    %v1071 = vpop.f32.mrf.mxu0
    %v1072 = vadd.f32 0.0, %v1071
    %v1073 = vpop.f32.mrf.mxu0
    %1074 = vdwg.mxu0
    %v1076 = vsel %vm391, %v928, 0
    %v1079 = vsel %vm936, %v932, 0
    %1081 = vmatprep.subr.bf16.mxu0 0
    %1082 = vmatpush1.bf16.msra.mxu0 0
    %1083 = vmatprep.subr.bf16.mxu0 0
    %1084 = vmatpush1.bf16.msra.mxu0 0
    %1085 = vmatprep.subr.bf16.mxu0 0
    %1086 = vmatpush1.bf16.msra.mxu0 0
    %1087 = vmatprep.subr.bf16.mxu0 0
    %1088 = vmatpush1.bf16.msra.mxu0 0
    %1089 = vmatprep.subr.bf16.mxu0 0
    %1090 = vmatpush1.bf16.msra.mxu0 0
    %1091 = vmatprep.subr.bf16.mxu0 0
    %1092 = vmatpush1.bf16.msra.mxu0 0
    %1093 = vmatprep.subr.bf16.mxu0 0
    %1094 = vmatpush1.bf16.msra.mxu0 0
    %1095 = vmatprep.subr.bf16.mxu0 0
    %1096 = vmatpush1.bf16.msra.mxu0 %v1079
    %1097 = vmatprep.subr.bf16.mxu0 0
    %1098 = vmatpush2.bf16.msra.mxu0 0
    %1099 = vmatprep.subr.bf16.mxu0 0
    %1100 = vmatpush2.bf16.msra.mxu0 0
    %1101 = vmatprep.subr.bf16.mxu0 0
    %1102 = vmatpush2.bf16.msra.mxu0 0
    %1103 = vmatprep.subr.bf16.mxu0 0
    %1104 = vmatpush2.bf16.msra.mxu0 0
    %1105 = vmatprep.subr.bf16.mxu0 0
    %1106 = vmatpush2.bf16.msra.mxu0 0
    %1107 = vmatprep.subr.bf16.mxu0 0
    %1108 = vmatpush2.bf16.msra.mxu0 0
    %1109 = vmatprep.subr.bf16.mxu0 0
    %1110 = vmatpush2.bf16.msra.mxu0 0
    %1111 = vmatprep.subr.bf16.mxu0 0
    %1112 = vmatpush2.bf16.msra.mxu0 0
    %1113 = vmatprep.mubr.bf16.mxu0 0
    %1114 = vmatmul.mubr.bf16.gmra.mxu0 %v1076
    %v1115 = vpop.f32.mrf.mxu0
    %v1116 = vadd.f32 0.0, %v1115
    %v1117 = vpop.f32.mrf.mxu0
    %v1118 = vpop.f32.mrf.mxu0
    %v1119 = vadd.f32 0.0, %v1118
    %v1120 = vpop.f32.mrf.mxu0
    %1121 = vdwg.mxu0
    %v1122 = vsel %vm51, %v975, 0.0
    %v1123 = vsel %vm51, %v1022, 0.0
    %v1124 = vadd.f32 %v1122, %v1123
    %v1125 = vsel %vm51, %v1069, 0.0
    %v1126 = vadd.f32 %v1124, %v1125
    %v1127 = vsel %vm51, %v1116, 0.0
    %v1128 = vadd.f32 %v1126, %v1127
    %v1129 = vsel %vm51, %v978, 0.0
    %v1130 = vsel %vm51, %v1025, 0.0
    %v1131 = vadd.f32 %v1129, %v1130
    %v1132 = vsel %vm51, %v1072, 0.0
    %v1133 = vadd.f32 %v1131, %v1132
    %v1134 = vsel %vm51, %v1119, 0.0
    %v1135 = vadd.f32 %v1133, %v1134
    %v1136 = vld [vmem:[%s5] sm:$0x1]
    %v1138 = vlaneseq
    %v1139 = vshrl.u32 %v1138, 7
    %v1140 = vsub.s32 0, %v1139
    %v1141 = vrot.slane %v1136, %v1140
    %v1143 = vadd.f32 %v1128, %v1141
    %v1144 = vadd.f32 %v1135, %v1141
    %1145 = vst.msk [vmem:[#allocation2] sm:$0xff] %vm51, %v1143
    %1146 = vst.msk [vmem:[#allocation2 + $0x8] sm:$0xff] %vm51, %v1144
    // Predicated region
    $region26: #{tpu_custom_call.1} parent=1 // pred_check
      _
    $region27: #{tpu_custom_call.1} parent=1 // pred_check_branch
      %1148 = sbr.rel (0) target = $region29
    $region28: #{tpu_custom_call.1} parent=1 // pred_region
      %s1150 = ssub.s32 256, 256
      %1151 = vsyncadd [#allocation3], %s1150
      %s1152 = sshll.u32 [#allocation2], 4
      %s1153 = int_to_ptr.vmem [resolvable:$true] %s1152
      %1158 = dma.vmem_to_hbm [thread:$0]  %s1153, 256, %s6, [#allocation3], 128, 128, 8
    $region29: #{tpu_custom_call.1} parent=1 // pred_fallthru
      _
    // Predicated region
    $region30: #{tpu_custom_call.1} parent=1 // pred_check
      _
    $region31: #{tpu_custom_call.1} parent=1 // pred_check_branch
      %1160 = sbr.rel (0) target = $region33
    $region32: #{tpu_custom_call.1} parent=1 // pred_region
      %s1162 = ssub.s32 512, 512
      %1163 = vsyncadd [#allocation5], %s1162
      %s1164 = sshll.u32 [#allocation4], 4
      %s1165 = int_to_ptr.vmem [resolvable:$true] %s1164
      %1170 = dma.vmem_to_hbm [thread:$0]  %s1165, 512, %s7, [#allocation5], 64, 64, 4
    $region33: #{tpu_custom_call.1} parent=1 // pred_fallthru
      _
    // Predicated region
    $region34: #{tpu_custom_call.1} parent=1 // pred_check
      _
    $region35: #{tpu_custom_call.1} parent=1 // pred_check_branch
      %1172 = sbr.rel (0) target = $region37
    $region36: #{tpu_custom_call.1} parent=1 // pred_region
      %1173 = dma.done [#allocation3], 256
    $region37: #{tpu_custom_call.1} parent=1 // pred_fallthru
      _
    // Predicated region
    $region38: #{tpu_custom_call.1} parent=1 // pred_check
      _
    $region39: #{tpu_custom_call.1} parent=1 // pred_check_branch
      %1175 = sbr.rel (0) target = $region41
    $region40: #{tpu_custom_call.1} parent=1 // pred_region
      %1176 = dma.done [#allocation5], 512
    $region41: #{tpu_custom_call.1} parent=1 // pred_fallthru
      _
    %1177 = vsyncpa [#allocation3], 1
    %1178 = vsyncpa [#allocation5], 1

</llo_original>
